<compile_context>
chip_gen: v7x
topology: tpu7x:2x2x1
jax: 0.10.0
libtpu: 0.0.40
codegen_flags: <defaults>
</compile_context>

<pallas_src>
import math

import jax
import jax.numpy as jnp
from jax.experimental import pallas as pl
from jax.experimental.pallas import tpu as pltpu

# ----------------------------------------------------------------------------
# Hyper-parameters (mirroring env attributes / constructor args of the module)
# ----------------------------------------------------------------------------
NUM_ASSETS    = 3                 # len(env.labels)
EMBED_SIZE    = 5                 # env.embed_dim
WINDOW_SIZE   = 4                 # env.window_size
BATCH         = 2
OUTPUT_DIM    = 6
USE_PRICE     = True
USE_ATTENTION = True
RNN_LAYERS    = 2
LINEAR_LAYERS = 2
DROPOUT_PROP  = 0.5               # eval mode -> identity

HIDDEN   = EMBED_SIZE + NUM_ASSETS                    # embed_size_with_cc = 8
SIZE_LAG = EMBED_SIZE * NUM_ASSETS + NUM_ASSETS       # 18
GRU_IN   = HIDDEN + (2 if USE_PRICE else 1)           # 10
N_SEQ    = NUM_ASSETS * BATCH                         # flattened GRU batch = 6
N_PAD    = ((N_SEQ + 7) // 8) * 8                     # sublane-aligned rows = 8
LIN_IN   = HIDDEN * NUM_ASSETS                        # 24
LANE     = 128                                        # lane-dense width
OUT_ROWS = 8                                          # sublane-aligned output rows


# ----------------------------------------------------------------------------
# Packed-parameter layout: every sub-array starts at lane 0 and an 8-aligned
# row; the slab is 128 lanes wide (lane-dense -> one contiguous DMA).
# ----------------------------------------------------------------------------
def _build_param_layout():
    layout = {}
    row = 0

    def add(name, nrows, ncols):
        nonlocal row
        layout[name] = (row, nrows, ncols)
        row += ((nrows + 7) // 8) * 8

    for l in range(RNN_LAYERS):
        in_l = GRU_IN if l == 0 else HIDDEN
        add(f"wih{l}", in_l, 3 * HIDDEN)          # W_ih^T  (gate order r,z,n)
        add(f"bgi{l}", 1, 3 * HIDDEN)             # b_ih + [b_hh_r, b_hh_z, 0]
        for g in ("r", "z", "n"):
            add(f"whh{l}_{g}", HIDDEN, HIDDEN)    # per-gate W_hh^T slabs
        add(f"bhn{l}", 1, HIDDEN)                 # b_hh_n
    for l in range(LINEAR_LAYERS):
        last = (l == LINEAR_LAYERS - 1)
        # Last layer block is declared 128 lanes wide (zero-padded beyond
        # OUTPUT_DIM) so the final matmul/store are lane-dense full-width.
        out_cols = LANE if last else LIN_IN
        add(f"w{l}", LIN_IN, out_cols)
        add(f"b{l}", 1, out_cols)
    return layout, row, LANE


PARAM_LAYOUT, PARAM_ROWS, PARAM_COLS = _build_param_layout()


def pack_params(gru_params, lin_params):
    """Pack all weights into one lane-dense f32 slab (single HBM->VMEM DMA)."""
    buf = jnp.zeros((PARAM_ROWS, PARAM_COLS), jnp.float32)

    def put(b, name, arr):
        r0, _, _ = PARAM_LAYOUT[name]
        arr = arr.astype(jnp.float32)
        return b.at[r0:r0 + arr.shape[0], :arr.shape[1]].set(arr)

    H = HIDDEN
    for l, (wih_t, whh_t, bih, bhh) in enumerate(gru_params):
        # fold b_ih and b_hh_{r,z} into one bias added with the hoisted matmul;
        # b_hh_n stays separate (it sits inside the r * (...) term of the n gate).
        bgi = jnp.concatenate([bih[:, :2 * H] + bhh[:, :2 * H], bih[:, 2 * H:]], axis=1)
        buf = put(buf, f"wih{l}", wih_t)
        buf = put(buf, f"bgi{l}", bgi)
        buf = put(buf, f"whh{l}_r", whh_t[:, :H])
        buf = put(buf, f"whh{l}_z", whh_t[:, H:2 * H])
        buf = put(buf, f"whh{l}_n", whh_t[:, 2 * H:])
        buf = put(buf, f"bhn{l}", bhh[:, 2 * H:])
    for l, (w_t, b) in enumerate(lin_params):
        buf = put(buf, f"w{l}", w_t)
        buf = put(buf, f"b{l}", b)
    return buf


# ----------------------------------------------------------------------------
# Pallas kernel (one grid step == one independent forward of batch size BATCH)
# ----------------------------------------------------------------------------
def _slab(p_ref, name):
    r0, nr, nc = PARAM_LAYOUT[name]
    return p_ref[r0:r0 + nr, :nc]


def _kernel(x_ref, p_ref, o_ref):
    """x_ref: (W*N_PAD, 128) time-major (lanes >= GRU_IN are zero).
       p_ref: (PARAM_ROWS, 128) packed params (resident across the grid).
       o_ref: (8, 128) lane-dense output tile; result lives in [:BATCH, :OUT]."""
    H = HIDDEN
    n = N_PAD
    f32 = jnp.float32
    bf16 = jnp.bfloat16

    seq = x_ref[:, :GRU_IN]                                   # (W*n, in), time-major
    outs = None
    for l in range(RNN_LAYERS):
        # Weight casts to bf16 are hoisted out of the time recurrence.
        wih   = _slab(p_ref, f"wih{l}").astype(bf16)          # (in_l, 3H)
        bgi   = _slab(p_ref, f"bgi{l}")                       # (1, 3H)   f32
        whh_r = _slab(p_ref, f"whh{l}_r").astype(bf16)        # (H, H), lane 0
        whh_z = _slab(p_ref, f"whh{l}_z").astype(bf16)
        whh_n = _slab(p_ref, f"whh{l}_n").astype(bf16)
        bhn   = jnp.broadcast_to(_slab(p_ref, f"bhn{l}"), (n, H))   # hoisted broadcast

        # Hoisted input projection for ALL timesteps of this layer (one matmul,
        # bf16 operands, f32 accumulate).
        gi = jnp.dot(seq.astype(bf16), wih, preferred_element_type=f32) + bgi  # (W*n, 3H)
        gi_r = gi[:, :H]                                      # gate splits: 2 lane
        gi_z = gi[:, H:2 * H]                                 # rotates per layer,
        gi_n = gi[:, 2 * H:3 * H]                             # off the serial path

        h = jnp.zeros((n, H), f32)
        outs = []
        for t in range(WINDOW_SIZE):
            r0 = t * n                                        # 8-aligned row slice
            hb = h.astype(bf16)                               # tiny, on-chain cast
            gh_r = jnp.dot(hb, whh_r, preferred_element_type=f32)
            gh_z = jnp.dot(hb, whh_z, preferred_element_type=f32)
            gh_n = jnp.dot(hb, whh_n, preferred_element_type=f32)
            r = jax.nn.sigmoid(gi_r[r0:r0 + n, :] + gh_r)
            z = jax.nn.sigmoid(gi_z[r0:r0 + n, :] + gh_z)
            cand = jnp.tanh(gi_n[r0:r0 + n, :] + r * (gh_n + bhn))
            h = (1.0 - z) * cand + z * h
            outs.append(h)
        if l < RNN_LAYERS - 1:                                # skip dead concat after last layer
            seq = jnp.concatenate(outs, axis=0)               # (W*n, H) input to next layer

    hidden = outs[-1]                                         # h_n[-1] == last-step top-layer output

    if USE_ATTENTION:
        scale = 1.0 / math.sqrt(H)
        scores = [jnp.sum(hidden * outs[t], axis=-1, keepdims=True) * scale
                  for t in range(WINDOW_SIZE)]
        m = scores[0]
        for t in range(1, WINDOW_SIZE):
            m = jnp.maximum(m, scores[t])
        exps = [jnp.exp(s - m) for s in scores]
        denom = exps[0]
        num = exps[0] * outs[0]
        for t in range(1, WINDOW_SIZE):
            denom = denom + exps[t]
            num = num + exps[t] * outs[t]
        hidden = num / denom                                  # exact softmax divide (off serial chain)

    # torch: _reshape_fortran(hidden, [B, A, H]).flatten(1) -> [b, a*H + h],
    # flattened-sequence row index n = a*B + b.  Assemble a (B, A*H) slab so the
    # first linear layer is a single matmul.  Padded GRU rows (>= N_SEQ) are
    # never read here.
    flat = jnp.concatenate(
        [hidden[a * BATCH:(a + 1) * BATCH, :] for a in range(NUM_ASSETS)], axis=1)
    # Row-pad to a full 8-row sublane tile: linear matmuls and the final store
    # are full-tile; the garbage-but-finite pad rows are sliced off in the wrapper.
    flat = jnp.concatenate([flat, jnp.zeros((OUT_ROWS - BATCH, LIN_IN), f32)], axis=0)

    zz = flat
    for l in range(LINEAR_LAYERS):
        w = _slab(p_ref, f"w{l}").astype(bf16)                # last layer: (LIN_IN, 128) zero-padded
        b = _slab(p_ref, f"b{l}")
        zz = jnp.dot(zz.astype(bf16), w, preferred_element_type=f32) + b
    o_ref[...] = zz                                           # (8, 128) full-width store


def run_hot_path(x, packed):
    """x: (G, W*N_PAD, 128) f32.  packed: (PARAM_ROWS, 128) f32.  -> (G, 8, 128)."""
    G = x.shape[0]
    return pl.pallas_call(
        _kernel,
        out_shape=jax.ShapeDtypeStruct((G, OUT_ROWS, LANE), jnp.float32),
        grid=(G,),
        in_specs=[
            # one state slab per grid step (pipelined, double-buffered)
            pl.BlockSpec((None, WINDOW_SIZE * N_PAD, LANE), lambda g: (g, 0, 0)),
            # parameter slab: constant block index -> resident, fetched once
            pl.BlockSpec((PARAM_ROWS, LANE), lambda g: (0, 0)),
        ],
        out_specs=pl.BlockSpec((None, OUT_ROWS, LANE), lambda g: (g, 0, 0)),
        compiler_params=pltpu.CompilerParams(dimension_semantics=("parallel",)),
    )(x, packed)


# ----------------------------------------------------------------------------
# Preprocessing glue (pure static slices/reshapes — no gathers), jit-traceable.
# Operates on a single (B, W*(A+size_lag)) state; vmapped over the stack.
# ----------------------------------------------------------------------------
def preprocess(state):
    b = state.shape[0]
    s = state.reshape(b, WINDOW_SIZE, -1)                          # (B, W, A + size_lag)
    positions = jnp.swapaxes(s[:, :, :NUM_ASSETS], 1, 2)           # (B, A, W)
    rest = s[:, :, NUM_ASSETS:]                                    # (B, W, size_lag)
    lag = WINDOW_SIZE

    # text block: within each window step, entries [A : A + A*E], embed-major / asset-minor
    text = rest[:, :, NUM_ASSETS:NUM_ASSETS + NUM_ASSETS * EMBED_SIZE]   # (B, W, A*E)
    st = text.reshape(b, lag, EMBED_SIZE, NUM_ASSETS)              # (B, W, E, A)
    st = jnp.transpose(st, (0, 1, 3, 2))                           # (B, W, A, E)

    # _create_w2v_input: prepend one-hot asset code; all-NaN embedding -> NaN cc -> 0 after fill
    all_nan = jnp.all(jnp.isnan(st), axis=-1, keepdims=True)       # (B, W, A, 1)
    onehot = jnp.eye(NUM_ASSETS, dtype=jnp.float32)
    cc = jnp.broadcast_to(onehot[None, None, :, :], (b, lag, NUM_ASSETS, NUM_ASSETS))
    cc = jnp.where(all_nan, 0.0, cc)
    emb = jnp.nan_to_num(st, nan=0.0)
    st = jnp.concatenate([cc, emb], axis=-1)                       # (B, W, A, A+E)
    st = jnp.swapaxes(st, 1, 2)                                    # (B, A, W, A+E)

    # TODO(synk): Dropout_partial_binary is identity in eval mode (no-op here).

    if USE_PRICE:
        # same C-order reshape as the torch module's np.reshape(..., [A, lag])
        price = rest[:, :, :NUM_ASSETS].reshape(b, NUM_ASSETS, lag)
        combined = jnp.concatenate([st, price[..., None], positions[..., None]], axis=-1)
    else:
        combined = jnp.concatenate([st, positions[..., None]], axis=-1)

    # _reshape_fortran(combined, [-1, W, D]): new sequence index n = a*B + b
    combined = jnp.transpose(combined, (1, 0, 2, 3)).reshape(NUM_ASSETS * b, WINDOW_SIZE, -1)
    return combined.astype(jnp.float32)


@jax.jit
def forward(states, packed):
    """states: (G, B, W*(A+SIZE_LAG)) stack of independent forwards -> (G, B, OUT)."""
    G = states.shape[0]
    comb = jax.vmap(preprocess)(states)                            # (G, N_SEQ, W, GRU_IN)
    # Time-major, row-padded to a multiple of 8 and lane-padded to 128 so the
    # per-grid-step x slab is one contiguous lane-dense DMA and every in-kernel
    # per-timestep slice is a sublane-tile-aligned row slice.
    x = jnp.transpose(comb, (0, 2, 1, 3))                          # (G, W, N_SEQ, D)
    x = jnp.pad(x, ((0, 0), (0, 0), (0, N_PAD - N_SEQ), (0, LANE - GRU_IN)))
    x = x.reshape(G, WINDOW_SIZE * N_PAD, LANE)
    out = run_hot_path(x, packed)                                  # (G, 8, 128)
    return out[:, :BATCH, :OUTPUT_DIM]


# ----------------------------------------------------------------------------
# Pure-JAX f32 reference (mirrors the torch math: combined GRU weights, exact softmax)
# ----------------------------------------------------------------------------
def reference_forward(state, gru_params, lin_params):
    x = preprocess(state)                                          # (N_SEQ, W, GRU_IN)
    n = x.shape[0]
    seq_in = [x[:, t, :] for t in range(WINDOW_SIZE)]
    outs = seq_in
    for (wih_t, whh_t, bih, bhh) in gru_params:
        h = jnp.zeros((n, HIDDEN), jnp.float32)
        outs = []
        for t in range(WINDOW_SIZE):
            gi = seq_in[t] @ wih_t + bih
            gh = h @ whh_t + bhh
            i_r, i_z, i_n = gi[:, :HIDDEN], gi[:, HIDDEN:2 * HIDDEN], gi[:, 2 * HIDDEN:]
            h_r, h_z, h_n = gh[:, :HIDDEN], gh[:, HIDDEN:2 * HIDDEN], gh[:, 2 * HIDDEN:]
            r = jax.nn.sigmoid(i_r + h_r)
            z = jax.nn.sigmoid(i_z + h_z)
            cand = jnp.tanh(i_n + r * h_n)
            h = (1.0 - z) * cand + z * h
            outs.append(h)
        seq_in = outs
    hidden = outs[-1]
    if USE_ATTENTION:
        scale = 1.0 / math.sqrt(HIDDEN)
        outs_arr = jnp.stack(outs, axis=1)                         # (N, W, H)
        scores = jnp.einsum('nh,nwh->nw', hidden, outs_arr) * scale
        w = jax.nn.softmax(scores, axis=-1)
        hidden = jnp.einsum('nw,nwh->nh', w, outs_arr)
    flat = hidden.reshape(NUM_ASSETS, BATCH, HIDDEN).transpose(1, 0, 2).reshape(BATCH, -1)
    z = flat
    for (w_t, b) in lin_params:
        z = z @ w_t + b
    return z


# ----------------------------------------------------------------------------
# Deterministic parameter init (PyTorch-style uniform bounds, synthetic values)
# ----------------------------------------------------------------------------
def init_params(key):
    def uni(k, shape, bound):
        return jax.random.uniform(k, shape, jnp.float32, -bound, bound)

    gru_params = []
    bound = 1.0 / math.sqrt(HIDDEN)
    for l in range(RNN_LAYERS):
        in_l = GRU_IN if l == 0 else HIDDEN
        k1, k2, k3, k4, key = jax.random.split(key, 5)
        gru_params.append((
            uni(k1, (in_l, 3 * HIDDEN), bound),     # W_ih^T   (gate order r,z,n)
            uni(k2, (HIDDEN, 3 * HIDDEN), bound),   # W_hh^T
            uni(k3, (1, 3 * HIDDEN), bound),        # b_ih
            uni(k4, (1, 3 * HIDDEN), bound),        # b_hh
        ))

    lin_params = []
    bound = 1.0 / math.sqrt(LIN_IN)
    for l in range(LINEAR_LAYERS):
        out_l = LIN_IN if l < LINEAR_LAYERS - 1 else OUTPUT_DIM
        k1, k2, key = jax.random.split(key, 3)
        lin_params.append((uni(k1, (LIN_IN, out_l), bound), uni(k2, (1, out_l), bound)))
    return gru_params, lin_params


if __name__ == "__main__":
    # A stack of G independent states; per state, layout per window step is
    # [positions(A) | price(A) | text embeddings (A*E, asset-minor)].
    G = 8
    states = jax.random.normal(
        jax.random.PRNGKey(0),
        (G, BATCH, WINDOW_SIZE * (NUM_ASSETS + SIZE_LAG)), dtype=jnp.float32)

    gru_params, lin_params = init_params(jax.random.PRNGKey(42))
    packed = pack_params(gru_params, lin_params)           # one lane-dense resident param slab

    out = jax.block_until_ready(forward(states, packed))   # single fused dispatch, grid=(G,)
    ref = jnp.stack([reference_forward(states[g], gru_params, lin_params) for g in range(G)])

    assert out.shape == (G, BATCH, OUTPUT_DIM), out.shape
    assert bool(jnp.all(jnp.isfinite(out)))
    # bf16 MXU operands (f32 accumulate) introduce ~1e-3 abs error vs the f32 reference.
    assert bool(jnp.allclose(out, ref, atol=2e-2, rtol=2e-2)), (out, ref)
    print("KERNEL_OK")
</pallas_src>

<mosaic_0001>
module attributes {stable_mosaic.version = 11 : i64} {
  func.func @_kernel(%arg0: i32, %arg1: memref<1x32x128xf32, #tpu.memory_space<vmem>>, %arg2: memref<168x128xf32, #tpu.memory_space<vmem>>, %arg3: memref<1x8x128xf32, #tpu.memory_space<vmem>>) attributes {dimension_semantics = [#tpu.dimension_semantics<parallel>], iteration_bounds = array<i64: 8>, scalar_prefetch = 0 : i64, scratch_operands = 0 : i64, tpu.core_type = #tpu.core_type<tc>, window_params = [{transform_indices = @transform_0, window_bounds = array<i64: 1, 32, 128>}, {pipeline_mode = #tpu.pipeline_mode<synchronous>, transform_indices = @transform_1, window_bounds = array<i64: 168, 128>}, {transform_indices = @transform_2, window_bounds = array<i64: 1, 8, 128>}]} {
    %c0 = arith.constant 0 : index
    %c0_0 = arith.constant 0 : index
    %c0_1 = arith.constant 0 : index
    %0 = vector.load %arg1[%c0, %c0_0, %c0_1] : memref<1x32x128xf32, #tpu.memory_space<vmem>>, vector<1x32x10xf32>
    %1 = vector.shape_cast %0 : vector<1x32x10xf32> to vector<32x10xf32>
    %c0_2 = arith.constant 0 : index
    %c0_3 = arith.constant 0 : index
    %2 = vector.load %arg2[%c0_2, %c0_3] : memref<168x128xf32, #tpu.memory_space<vmem>>, vector<10x24xf32>
    %3 = arith.truncf %2 : vector<10x24xf32> to vector<10x24xbf16>
    %c16 = arith.constant 16 : index
    %c0_4 = arith.constant 0 : index
    %4 = vector.load %arg2[%c16, %c0_4] : memref<168x128xf32, #tpu.memory_space<vmem>>, vector<1x24xf32>
    %c24 = arith.constant 24 : index
    %c0_5 = arith.constant 0 : index
    %5 = vector.load %arg2[%c24, %c0_5] : memref<168x128xf32, #tpu.memory_space<vmem>>, vector<8x8xf32>
    %6 = arith.truncf %5 : vector<8x8xf32> to vector<8x8xbf16>
    %c32 = arith.constant 32 : index
    %c0_6 = arith.constant 0 : index
    %7 = vector.load %arg2[%c32, %c0_6] : memref<168x128xf32, #tpu.memory_space<vmem>>, vector<8x8xf32>
    %8 = arith.truncf %7 : vector<8x8xf32> to vector<8x8xbf16>
    %c40 = arith.constant 40 : index
    %c0_7 = arith.constant 0 : index
    %9 = vector.load %arg2[%c40, %c0_7] : memref<168x128xf32, #tpu.memory_space<vmem>>, vector<8x8xf32>
    %10 = arith.truncf %9 : vector<8x8xf32> to vector<8x8xbf16>
    %c48 = arith.constant 48 : index
    %c0_8 = arith.constant 0 : index
    %11 = vector.load %arg2[%c48, %c0_8] : memref<168x128xf32, #tpu.memory_space<vmem>>, vector<1x8xf32>
    %12 = vector.shape_cast %11 : vector<1x8xf32> to vector<1x8xf32>
    %13 = vector.broadcast %12 : vector<1x8xf32> to vector<8x8xf32>
    %14 = arith.truncf %1 : vector<32x10xf32> to vector<32x10xbf16>
    %cst = arith.constant dense<0.000000e+00> : vector<32x24xf32>
    %15 = tpu.matmul %14, %3, %cst {dimension_numbers = #tpu.dot_dimension_numbers<[1], [0], [0], [1], [0, 0, 1, 1], [], []>} : vector<32x10xbf16>, vector<10x24xbf16>, vector<32x24xf32> -> vector<32x24xf32>
    %16 = vector.broadcast %4 : vector<1x24xf32> to vector<32x24xf32>
    %17 = arith.addf %15, %16 : vector<32x24xf32>
    %18 = vector.extract_strided_slice %17 {offsets = [0, 0], sizes = [32, 8], strides = [1, 1]} : vector<32x24xf32> to vector<32x8xf32>
    %19 = vector.extract_strided_slice %17 {offsets = [0, 8], sizes = [32, 8], strides = [1, 1]} : vector<32x24xf32> to vector<32x8xf32>
    %20 = vector.extract_strided_slice %17 {offsets = [0, 16], sizes = [32, 8], strides = [1, 1]} : vector<32x24xf32> to vector<32x8xf32>
    %cst_9 = arith.constant 0.000000e+00 : f32
    %21 = vector.broadcast %cst_9 : f32 to vector<8x8xf32>
    %22 = arith.truncf %21 : vector<8x8xf32> to vector<8x8xbf16>
    %cst_10 = arith.constant dense<0.000000e+00> : vector<8x8xf32>
    %23 = tpu.matmul %22, %6, %cst_10 {dimension_numbers = #tpu.dot_dimension_numbers<[1], [0], [0], [1], [0, 0, 1, 1], [], []>} : vector<8x8xbf16>, vector<8x8xbf16>, vector<8x8xf32> -> vector<8x8xf32>
    %cst_11 = arith.constant dense<0.000000e+00> : vector<8x8xf32>
    %24 = tpu.matmul %22, %8, %cst_11 {dimension_numbers = #tpu.dot_dimension_numbers<[1], [0], [0], [1], [0, 0, 1, 1], [], []>} : vector<8x8xbf16>, vector<8x8xbf16>, vector<8x8xf32> -> vector<8x8xf32>
    %cst_12 = arith.constant dense<0.000000e+00> : vector<8x8xf32>
    %25 = tpu.matmul %22, %10, %cst_12 {dimension_numbers = #tpu.dot_dimension_numbers<[1], [0], [0], [1], [0, 0, 1, 1], [], []>} : vector<8x8xbf16>, vector<8x8xbf16>, vector<8x8xf32> -> vector<8x8xf32>
    %26 = vector.extract_strided_slice %18 {offsets = [0, 0], sizes = [8, 8], strides = [1, 1]} : vector<32x8xf32> to vector<8x8xf32>
    %27 = arith.addf %26, %23 : vector<8x8xf32>
    %28 = arith.negf %27 : vector<8x8xf32>
    %29 = math.exp %28 : vector<8x8xf32>
    %cst_13 = arith.constant 1.000000e+00 : f32
    %30 = vector.broadcast %cst_13 : f32 to vector<8x8xf32>
    %31 = arith.addf %30, %29 : vector<8x8xf32>
    %32 = arith.divf %30, %31 : vector<8x8xf32>
    %33 = vector.extract_strided_slice %19 {offsets = [0, 0], sizes = [8, 8], strides = [1, 1]} : vector<32x8xf32> to vector<8x8xf32>
    %34 = arith.addf %33, %24 : vector<8x8xf32>
    %35 = arith.negf %34 : vector<8x8xf32>
    %36 = math.exp %35 : vector<8x8xf32>
    %cst_14 = arith.constant 1.000000e+00 : f32
    %37 = vector.broadcast %cst_14 : f32 to vector<8x8xf32>
    %38 = arith.addf %37, %36 : vector<8x8xf32>
    %39 = arith.divf %37, %38 : vector<8x8xf32>
    %40 = vector.extract_strided_slice %20 {offsets = [0, 0], sizes = [8, 8], strides = [1, 1]} : vector<32x8xf32> to vector<8x8xf32>
    %41 = arith.addf %25, %13 : vector<8x8xf32>
    %42 = arith.mulf %32, %41 : vector<8x8xf32>
    %43 = arith.addf %40, %42 : vector<8x8xf32>
    %44 = math.tanh %43 : vector<8x8xf32>
    %cst_15 = arith.constant 1.000000e+00 : f32
    %45 = vector.broadcast %cst_15 : f32 to vector<8x8xf32>
    %46 = arith.subf %45, %39 : vector<8x8xf32>
    %47 = arith.mulf %46, %44 : vector<8x8xf32>
    %48 = arith.mulf %39, %21 : vector<8x8xf32>
    %49 = arith.addf %47, %48 : vector<8x8xf32>
    %50 = arith.truncf %49 : vector<8x8xf32> to vector<8x8xbf16>
    %cst_16 = arith.constant dense<0.000000e+00> : vector<8x8xf32>
    %51 = tpu.matmul %50, %6, %cst_16 {dimension_numbers = #tpu.dot_dimension_numbers<[1], [0], [0], [1], [0, 0, 1, 1], [], []>} : vector<8x8xbf16>, vector<8x8xbf16>, vector<8x8xf32> -> vector<8x8xf32>
    %cst_17 = arith.constant dense<0.000000e+00> : vector<8x8xf32>
    %52 = tpu.matmul %50, %8, %cst_17 {dimension_numbers = #tpu.dot_dimension_numbers<[1], [0], [0], [1], [0, 0, 1, 1], [], []>} : vector<8x8xbf16>, vector<8x8xbf16>, vector<8x8xf32> -> vector<8x8xf32>
    %cst_18 = arith.constant dense<0.000000e+00> : vector<8x8xf32>
    %53 = tpu.matmul %50, %10, %cst_18 {dimension_numbers = #tpu.dot_dimension_numbers<[1], [0], [0], [1], [0, 0, 1, 1], [], []>} : vector<8x8xbf16>, vector<8x8xbf16>, vector<8x8xf32> -> vector<8x8xf32>
    %54 = vector.extract_strided_slice %18 {offsets = [8, 0], sizes = [8, 8], strides = [1, 1]} : vector<32x8xf32> to vector<8x8xf32>
    %55 = arith.addf %54, %51 : vector<8x8xf32>
    %56 = arith.negf %55 : vector<8x8xf32>
    %57 = math.exp %56 : vector<8x8xf32>
    %cst_19 = arith.constant 1.000000e+00 : f32
    %58 = vector.broadcast %cst_19 : f32 to vector<8x8xf32>
    %59 = arith.addf %58, %57 : vector<8x8xf32>
    %60 = arith.divf %58, %59 : vector<8x8xf32>
    %61 = vector.extract_strided_slice %19 {offsets = [8, 0], sizes = [8, 8], strides = [1, 1]} : vector<32x8xf32> to vector<8x8xf32>
    %62 = arith.addf %61, %52 : vector<8x8xf32>
    %63 = arith.negf %62 : vector<8x8xf32>
    %64 = math.exp %63 : vector<8x8xf32>
    %cst_20 = arith.constant 1.000000e+00 : f32
    %65 = vector.broadcast %cst_20 : f32 to vector<8x8xf32>
    %66 = arith.addf %65, %64 : vector<8x8xf32>
    %67 = arith.divf %65, %66 : vector<8x8xf32>
    %68 = vector.extract_strided_slice %20 {offsets = [8, 0], sizes = [8, 8], strides = [1, 1]} : vector<32x8xf32> to vector<8x8xf32>
    %69 = arith.addf %53, %13 : vector<8x8xf32>
    %70 = arith.mulf %60, %69 : vector<8x8xf32>
    %71 = arith.addf %68, %70 : vector<8x8xf32>
    %72 = math.tanh %71 : vector<8x8xf32>
    %cst_21 = arith.constant 1.000000e+00 : f32
    %73 = vector.broadcast %cst_21 : f32 to vector<8x8xf32>
    %74 = arith.subf %73, %67 : vector<8x8xf32>
    %75 = arith.mulf %74, %72 : vector<8x8xf32>
    %76 = arith.mulf %67, %49 : vector<8x8xf32>
    %77 = arith.addf %75, %76 : vector<8x8xf32>
    %78 = arith.truncf %77 : vector<8x8xf32> to vector<8x8xbf16>
    %cst_22 = arith.constant dense<0.000000e+00> : vector<8x8xf32>
    %79 = tpu.matmul %78, %6, %cst_22 {dimension_numbers = #tpu.dot_dimension_numbers<[1], [0], [0], [1], [0, 0, 1, 1], [], []>} : vector<8x8xbf16>, vector<8x8xbf16>, vector<8x8xf32> -> vector<8x8xf32>
    %cst_23 = arith.constant dense<0.000000e+00> : vector<8x8xf32>
    %80 = tpu.matmul %78, %8, %cst_23 {dimension_numbers = #tpu.dot_dimension_numbers<[1], [0], [0], [1], [0, 0, 1, 1], [], []>} : vector<8x8xbf16>, vector<8x8xbf16>, vector<8x8xf32> -> vector<8x8xf32>
    %cst_24 = arith.constant dense<0.000000e+00> : vector<8x8xf32>
    %81 = tpu.matmul %78, %10, %cst_24 {dimension_numbers = #tpu.dot_dimension_numbers<[1], [0], [0], [1], [0, 0, 1, 1], [], []>} : vector<8x8xbf16>, vector<8x8xbf16>, vector<8x8xf32> -> vector<8x8xf32>
    %82 = vector.extract_strided_slice %18 {offsets = [16, 0], sizes = [8, 8], strides = [1, 1]} : vector<32x8xf32> to vector<8x8xf32>
    %83 = arith.addf %82, %79 : vector<8x8xf32>
    %84 = arith.negf %83 : vector<8x8xf32>
    %85 = math.exp %84 : vector<8x8xf32>
    %cst_25 = arith.constant 1.000000e+00 : f32
    %86 = vector.broadcast %cst_25 : f32 to vector<8x8xf32>
    %87 = arith.addf %86, %85 : vector<8x8xf32>
    %88 = arith.divf %86, %87 : vector<8x8xf32>
    %89 = vector.extract_strided_slice %19 {offsets = [16, 0], sizes = [8, 8], strides = [1, 1]} : vector<32x8xf32> to vector<8x8xf32>
    %90 = arith.addf %89, %80 : vector<8x8xf32>
    %91 = arith.negf %90 : vector<8x8xf32>
    %92 = math.exp %91 : vector<8x8xf32>
    %cst_26 = arith.constant 1.000000e+00 : f32
    %93 = vector.broadcast %cst_26 : f32 to vector<8x8xf32>
    %94 = arith.addf %93, %92 : vector<8x8xf32>
    %95 = arith.divf %93, %94 : vector<8x8xf32>
    %96 = vector.extract_strided_slice %20 {offsets = [16, 0], sizes = [8, 8], strides = [1, 1]} : vector<32x8xf32> to vector<8x8xf32>
    %97 = arith.addf %81, %13 : vector<8x8xf32>
    %98 = arith.mulf %88, %97 : vector<8x8xf32>
    %99 = arith.addf %96, %98 : vector<8x8xf32>
    %100 = math.tanh %99 : vector<8x8xf32>
    %cst_27 = arith.constant 1.000000e+00 : f32
    %101 = vector.broadcast %cst_27 : f32 to vector<8x8xf32>
    %102 = arith.subf %101, %95 : vector<8x8xf32>
    %103 = arith.mulf %102, %100 : vector<8x8xf32>
    %104 = arith.mulf %95, %77 : vector<8x8xf32>
    %105 = arith.addf %103, %104 : vector<8x8xf32>
    %106 = arith.truncf %105 : vector<8x8xf32> to vector<8x8xbf16>
    %cst_28 = arith.constant dense<0.000000e+00> : vector<8x8xf32>
    %107 = tpu.matmul %106, %6, %cst_28 {dimension_numbers = #tpu.dot_dimension_numbers<[1], [0], [0], [1], [0, 0, 1, 1], [], []>} : vector<8x8xbf16>, vector<8x8xbf16>, vector<8x8xf32> -> vector<8x8xf32>
    %cst_29 = arith.constant dense<0.000000e+00> : vector<8x8xf32>
    %108 = tpu.matmul %106, %8, %cst_29 {dimension_numbers = #tpu.dot_dimension_numbers<[1], [0], [0], [1], [0, 0, 1, 1], [], []>} : vector<8x8xbf16>, vector<8x8xbf16>, vector<8x8xf32> -> vector<8x8xf32>
    %cst_30 = arith.constant dense<0.000000e+00> : vector<8x8xf32>
    %109 = tpu.matmul %106, %10, %cst_30 {dimension_numbers = #tpu.dot_dimension_numbers<[1], [0], [0], [1], [0, 0, 1, 1], [], []>} : vector<8x8xbf16>, vector<8x8xbf16>, vector<8x8xf32> -> vector<8x8xf32>
    %110 = vector.extract_strided_slice %18 {offsets = [24, 0], sizes = [8, 8], strides = [1, 1]} : vector<32x8xf32> to vector<8x8xf32>
    %111 = arith.addf %110, %107 : vector<8x8xf32>
    %112 = arith.negf %111 : vector<8x8xf32>
    %113 = math.exp %112 : vector<8x8xf32>
    %cst_31 = arith.constant 1.000000e+00 : f32
    %114 = vector.broadcast %cst_31 : f32 to vector<8x8xf32>
    %115 = arith.addf %114, %113 : vector<8x8xf32>
    %116 = arith.divf %114, %115 : vector<8x8xf32>
    %117 = vector.extract_strided_slice %19 {offsets = [24, 0], sizes = [8, 8], strides = [1, 1]} : vector<32x8xf32> to vector<8x8xf32>
    %118 = arith.addf %117, %108 : vector<8x8xf32>
    %119 = arith.negf %118 : vector<8x8xf32>
    %120 = math.exp %119 : vector<8x8xf32>
    %cst_32 = arith.constant 1.000000e+00 : f32
    %121 = vector.broadcast %cst_32 : f32 to vector<8x8xf32>
    %122 = arith.addf %121, %120 : vector<8x8xf32>
    %123 = arith.divf %121, %122 : vector<8x8xf32>
    %124 = vector.extract_strided_slice %20 {offsets = [24, 0], sizes = [8, 8], strides = [1, 1]} : vector<32x8xf32> to vector<8x8xf32>
    %125 = arith.addf %109, %13 : vector<8x8xf32>
    %126 = arith.mulf %116, %125 : vector<8x8xf32>
    %127 = arith.addf %124, %126 : vector<8x8xf32>
    %128 = math.tanh %127 : vector<8x8xf32>
    %cst_33 = arith.constant 1.000000e+00 : f32
    %129 = vector.broadcast %cst_33 : f32 to vector<8x8xf32>
    %130 = arith.subf %129, %123 : vector<8x8xf32>
    %131 = arith.mulf %130, %128 : vector<8x8xf32>
    %132 = arith.mulf %123, %105 : vector<8x8xf32>
    %133 = arith.addf %131, %132 : vector<8x8xf32>
    %134 = tpu.concatenate %49, %77, %105, %133 in 0 : vector<8x8xf32>, vector<8x8xf32>, vector<8x8xf32>, vector<8x8xf32> -> vector<32x8xf32>
    %c56 = arith.constant 56 : index
    %c0_34 = arith.constant 0 : index
    %135 = vector.load %arg2[%c56, %c0_34] : memref<168x128xf32, #tpu.memory_space<vmem>>, vector<8x24xf32>
    %136 = arith.truncf %135 : vector<8x24xf32> to vector<8x24xbf16>
    %c64 = arith.constant 64 : index
    %c0_35 = arith.constant 0 : index
    %137 = vector.load %arg2[%c64, %c0_35] : memref<168x128xf32, #tpu.memory_space<vmem>>, vector<1x24xf32>
    %c72 = arith.constant 72 : index
    %c0_36 = arith.constant 0 : index
    %138 = vector.load %arg2[%c72, %c0_36] : memref<168x128xf32, #tpu.memory_space<vmem>>, vector<8x8xf32>
    %139 = arith.truncf %138 : vector<8x8xf32> to vector<8x8xbf16>
    %c80 = arith.constant 80 : index
    %c0_37 = arith.constant 0 : index
    %140 = vector.load %arg2[%c80, %c0_37] : memref<168x128xf32, #tpu.memory_space<vmem>>, vector<8x8xf32>
    %141 = arith.truncf %140 : vector<8x8xf32> to vector<8x8xbf16>
    %c88 = arith.constant 88 : index
    %c0_38 = arith.constant 0 : index
    %142 = vector.load %arg2[%c88, %c0_38] : memref<168x128xf32, #tpu.memory_space<vmem>>, vector<8x8xf32>
    %143 = arith.truncf %142 : vector<8x8xf32> to vector<8x8xbf16>
    %c96 = arith.constant 96 : index
    %c0_39 = arith.constant 0 : index
    %144 = vector.load %arg2[%c96, %c0_39] : memref<168x128xf32, #tpu.memory_space<vmem>>, vector<1x8xf32>
    %145 = vector.shape_cast %144 : vector<1x8xf32> to vector<1x8xf32>
    %146 = vector.broadcast %145 : vector<1x8xf32> to vector<8x8xf32>
    %147 = arith.truncf %134 : vector<32x8xf32> to vector<32x8xbf16>
    %cst_40 = arith.constant dense<0.000000e+00> : vector<32x24xf32>
    %148 = tpu.matmul %147, %136, %cst_40 {dimension_numbers = #tpu.dot_dimension_numbers<[1], [0], [0], [1], [0, 0, 1, 1], [], []>} : vector<32x8xbf16>, vector<8x24xbf16>, vector<32x24xf32> -> vector<32x24xf32>
    %149 = vector.broadcast %137 : vector<1x24xf32> to vector<32x24xf32>
    %150 = arith.addf %148, %149 : vector<32x24xf32>
    %151 = vector.extract_strided_slice %150 {offsets = [0, 0], sizes = [32, 8], strides = [1, 1]} : vector<32x24xf32> to vector<32x8xf32>
    %152 = vector.extract_strided_slice %150 {offsets = [0, 8], sizes = [32, 8], strides = [1, 1]} : vector<32x24xf32> to vector<32x8xf32>
    %153 = vector.extract_strided_slice %150 {offsets = [0, 16], sizes = [32, 8], strides = [1, 1]} : vector<32x24xf32> to vector<32x8xf32>
    %cst_41 = arith.constant 0.000000e+00 : f32
    %154 = vector.broadcast %cst_41 : f32 to vector<8x8xf32>
    %155 = arith.truncf %154 : vector<8x8xf32> to vector<8x8xbf16>
    %cst_42 = arith.constant dense<0.000000e+00> : vector<8x8xf32>
    %156 = tpu.matmul %155, %139, %cst_42 {dimension_numbers = #tpu.dot_dimension_numbers<[1], [0], [0], [1], [0, 0, 1, 1], [], []>} : vector<8x8xbf16>, vector<8x8xbf16>, vector<8x8xf32> -> vector<8x8xf32>
    %cst_43 = arith.constant dense<0.000000e+00> : vector<8x8xf32>
    %157 = tpu.matmul %155, %141, %cst_43 {dimension_numbers = #tpu.dot_dimension_numbers<[1], [0], [0], [1], [0, 0, 1, 1], [], []>} : vector<8x8xbf16>, vector<8x8xbf16>, vector<8x8xf32> -> vector<8x8xf32>
    %cst_44 = arith.constant dense<0.000000e+00> : vector<8x8xf32>
    %158 = tpu.matmul %155, %143, %cst_44 {dimension_numbers = #tpu.dot_dimension_numbers<[1], [0], [0], [1], [0, 0, 1, 1], [], []>} : vector<8x8xbf16>, vector<8x8xbf16>, vector<8x8xf32> -> vector<8x8xf32>
    %159 = vector.extract_strided_slice %151 {offsets = [0, 0], sizes = [8, 8], strides = [1, 1]} : vector<32x8xf32> to vector<8x8xf32>
    %160 = arith.addf %159, %156 : vector<8x8xf32>
    %161 = arith.negf %160 : vector<8x8xf32>
    %162 = math.exp %161 : vector<8x8xf32>
    %cst_45 = arith.constant 1.000000e+00 : f32
    %163 = vector.broadcast %cst_45 : f32 to vector<8x8xf32>
    %164 = arith.addf %163, %162 : vector<8x8xf32>
    %165 = arith.divf %163, %164 : vector<8x8xf32>
    %166 = vector.extract_strided_slice %152 {offsets = [0, 0], sizes = [8, 8], strides = [1, 1]} : vector<32x8xf32> to vector<8x8xf32>
    %167 = arith.addf %166, %157 : vector<8x8xf32>
    %168 = arith.negf %167 : vector<8x8xf32>
    %169 = math.exp %168 : vector<8x8xf32>
    %cst_46 = arith.constant 1.000000e+00 : f32
    %170 = vector.broadcast %cst_46 : f32 to vector<8x8xf32>
    %171 = arith.addf %170, %169 : vector<8x8xf32>
    %172 = arith.divf %170, %171 : vector<8x8xf32>
    %173 = vector.extract_strided_slice %153 {offsets = [0, 0], sizes = [8, 8], strides = [1, 1]} : vector<32x8xf32> to vector<8x8xf32>
    %174 = arith.addf %158, %146 : vector<8x8xf32>
    %175 = arith.mulf %165, %174 : vector<8x8xf32>
    %176 = arith.addf %173, %175 : vector<8x8xf32>
    %177 = math.tanh %176 : vector<8x8xf32>
    %cst_47 = arith.constant 1.000000e+00 : f32
    %178 = vector.broadcast %cst_47 : f32 to vector<8x8xf32>
    %179 = arith.subf %178, %172 : vector<8x8xf32>
    %180 = arith.mulf %179, %177 : vector<8x8xf32>
    %181 = arith.mulf %172, %154 : vector<8x8xf32>
    %182 = arith.addf %180, %181 : vector<8x8xf32>
    %183 = arith.truncf %182 : vector<8x8xf32> to vector<8x8xbf16>
    %cst_48 = arith.constant dense<0.000000e+00> : vector<8x8xf32>
    %184 = tpu.matmul %183, %139, %cst_48 {dimension_numbers = #tpu.dot_dimension_numbers<[1], [0], [0], [1], [0, 0, 1, 1], [], []>} : vector<8x8xbf16>, vector<8x8xbf16>, vector<8x8xf32> -> vector<8x8xf32>
    %cst_49 = arith.constant dense<0.000000e+00> : vector<8x8xf32>
    %185 = tpu.matmul %183, %141, %cst_49 {dimension_numbers = #tpu.dot_dimension_numbers<[1], [0], [0], [1], [0, 0, 1, 1], [], []>} : vector<8x8xbf16>, vector<8x8xbf16>, vector<8x8xf32> -> vector<8x8xf32>
    %cst_50 = arith.constant dense<0.000000e+00> : vector<8x8xf32>
    %186 = tpu.matmul %183, %143, %cst_50 {dimension_numbers = #tpu.dot_dimension_numbers<[1], [0], [0], [1], [0, 0, 1, 1], [], []>} : vector<8x8xbf16>, vector<8x8xbf16>, vector<8x8xf32> -> vector<8x8xf32>
    %187 = vector.extract_strided_slice %151 {offsets = [8, 0], sizes = [8, 8], strides = [1, 1]} : vector<32x8xf32> to vector<8x8xf32>
    %188 = arith.addf %187, %184 : vector<8x8xf32>
    %189 = arith.negf %188 : vector<8x8xf32>
    %190 = math.exp %189 : vector<8x8xf32>
    %cst_51 = arith.constant 1.000000e+00 : f32
    %191 = vector.broadcast %cst_51 : f32 to vector<8x8xf32>
    %192 = arith.addf %191, %190 : vector<8x8xf32>
    %193 = arith.divf %191, %192 : vector<8x8xf32>
    %194 = vector.extract_strided_slice %152 {offsets = [8, 0], sizes = [8, 8], strides = [1, 1]} : vector<32x8xf32> to vector<8x8xf32>
    %195 = arith.addf %194, %185 : vector<8x8xf32>
    %196 = arith.negf %195 : vector<8x8xf32>
    %197 = math.exp %196 : vector<8x8xf32>
    %cst_52 = arith.constant 1.000000e+00 : f32
    %198 = vector.broadcast %cst_52 : f32 to vector<8x8xf32>
    %199 = arith.addf %198, %197 : vector<8x8xf32>
    %200 = arith.divf %198, %199 : vector<8x8xf32>
    %201 = vector.extract_strided_slice %153 {offsets = [8, 0], sizes = [8, 8], strides = [1, 1]} : vector<32x8xf32> to vector<8x8xf32>
    %202 = arith.addf %186, %146 : vector<8x8xf32>
    %203 = arith.mulf %193, %202 : vector<8x8xf32>
    %204 = arith.addf %201, %203 : vector<8x8xf32>
    %205 = math.tanh %204 : vector<8x8xf32>
    %cst_53 = arith.constant 1.000000e+00 : f32
    %206 = vector.broadcast %cst_53 : f32 to vector<8x8xf32>
    %207 = arith.subf %206, %200 : vector<8x8xf32>
    %208 = arith.mulf %207, %205 : vector<8x8xf32>
    %209 = arith.mulf %200, %182 : vector<8x8xf32>
    %210 = arith.addf %208, %209 : vector<8x8xf32>
    %211 = arith.truncf %210 : vector<8x8xf32> to vector<8x8xbf16>
    %cst_54 = arith.constant dense<0.000000e+00> : vector<8x8xf32>
    %212 = tpu.matmul %211, %139, %cst_54 {dimension_numbers = #tpu.dot_dimension_numbers<[1], [0], [0], [1], [0, 0, 1, 1], [], []>} : vector<8x8xbf16>, vector<8x8xbf16>, vector<8x8xf32> -> vector<8x8xf32>
    %cst_55 = arith.constant dense<0.000000e+00> : vector<8x8xf32>
    %213 = tpu.matmul %211, %141, %cst_55 {dimension_numbers = #tpu.dot_dimension_numbers<[1], [0], [0], [1], [0, 0, 1, 1], [], []>} : vector<8x8xbf16>, vector<8x8xbf16>, vector<8x8xf32> -> vector<8x8xf32>
    %cst_56 = arith.constant dense<0.000000e+00> : vector<8x8xf32>
    %214 = tpu.matmul %211, %143, %cst_56 {dimension_numbers = #tpu.dot_dimension_numbers<[1], [0], [0], [1], [0, 0, 1, 1], [], []>} : vector<8x8xbf16>, vector<8x8xbf16>, vector<8x8xf32> -> vector<8x8xf32>
    %215 = vector.extract_strided_slice %151 {offsets = [16, 0], sizes = [8, 8], strides = [1, 1]} : vector<32x8xf32> to vector<8x8xf32>
    %216 = arith.addf %215, %212 : vector<8x8xf32>
    %217 = arith.negf %216 : vector<8x8xf32>
    %218 = math.exp %217 : vector<8x8xf32>
    %cst_57 = arith.constant 1.000000e+00 : f32
    %219 = vector.broadcast %cst_57 : f32 to vector<8x8xf32>
    %220 = arith.addf %219, %218 : vector<8x8xf32>
    %221 = arith.divf %219, %220 : vector<8x8xf32>
    %222 = vector.extract_strided_slice %152 {offsets = [16, 0], sizes = [8, 8], strides = [1, 1]} : vector<32x8xf32> to vector<8x8xf32>
    %223 = arith.addf %222, %213 : vector<8x8xf32>
    %224 = arith.negf %223 : vector<8x8xf32>
    %225 = math.exp %224 : vector<8x8xf32>
    %cst_58 = arith.constant 1.000000e+00 : f32
    %226 = vector.broadcast %cst_58 : f32 to vector<8x8xf32>
    %227 = arith.addf %226, %225 : vector<8x8xf32>
    %228 = arith.divf %226, %227 : vector<8x8xf32>
    %229 = vector.extract_strided_slice %153 {offsets = [16, 0], sizes = [8, 8], strides = [1, 1]} : vector<32x8xf32> to vector<8x8xf32>
    %230 = arith.addf %214, %146 : vector<8x8xf32>
    %231 = arith.mulf %221, %230 : vector<8x8xf32>
    %232 = arith.addf %229, %231 : vector<8x8xf32>
    %233 = math.tanh %232 : vector<8x8xf32>
    %cst_59 = arith.constant 1.000000e+00 : f32
    %234 = vector.broadcast %cst_59 : f32 to vector<8x8xf32>
    %235 = arith.subf %234, %228 : vector<8x8xf32>
    %236 = arith.mulf %235, %233 : vector<8x8xf32>
    %237 = arith.mulf %228, %210 : vector<8x8xf32>
    %238 = arith.addf %236, %237 : vector<8x8xf32>
    %239 = arith.truncf %238 : vector<8x8xf32> to vector<8x8xbf16>
    %cst_60 = arith.constant dense<0.000000e+00> : vector<8x8xf32>
    %240 = tpu.matmul %239, %139, %cst_60 {dimension_numbers = #tpu.dot_dimension_numbers<[1], [0], [0], [1], [0, 0, 1, 1], [], []>} : vector<8x8xbf16>, vector<8x8xbf16>, vector<8x8xf32> -> vector<8x8xf32>
    %cst_61 = arith.constant dense<0.000000e+00> : vector<8x8xf32>
    %241 = tpu.matmul %239, %141, %cst_61 {dimension_numbers = #tpu.dot_dimension_numbers<[1], [0], [0], [1], [0, 0, 1, 1], [], []>} : vector<8x8xbf16>, vector<8x8xbf16>, vector<8x8xf32> -> vector<8x8xf32>
    %cst_62 = arith.constant dense<0.000000e+00> : vector<8x8xf32>
    %242 = tpu.matmul %239, %143, %cst_62 {dimension_numbers = #tpu.dot_dimension_numbers<[1], [0], [0], [1], [0, 0, 1, 1], [], []>} : vector<8x8xbf16>, vector<8x8xbf16>, vector<8x8xf32> -> vector<8x8xf32>
    %243 = vector.extract_strided_slice %151 {offsets = [24, 0], sizes = [8, 8], strides = [1, 1]} : vector<32x8xf32> to vector<8x8xf32>
    %244 = arith.addf %243, %240 : vector<8x8xf32>
    %245 = arith.negf %244 : vector<8x8xf32>
    %246 = math.exp %245 : vector<8x8xf32>
    %cst_63 = arith.constant 1.000000e+00 : f32
    %247 = vector.broadcast %cst_63 : f32 to vector<8x8xf32>
    %248 = arith.addf %247, %246 : vector<8x8xf32>
    %249 = arith.divf %247, %248 : vector<8x8xf32>
    %250 = vector.extract_strided_slice %152 {offsets = [24, 0], sizes = [8, 8], strides = [1, 1]} : vector<32x8xf32> to vector<8x8xf32>
    %251 = arith.addf %250, %241 : vector<8x8xf32>
    %252 = arith.negf %251 : vector<8x8xf32>
    %253 = math.exp %252 : vector<8x8xf32>
    %cst_64 = arith.constant 1.000000e+00 : f32
    %254 = vector.broadcast %cst_64 : f32 to vector<8x8xf32>
    %255 = arith.addf %254, %253 : vector<8x8xf32>
    %256 = arith.divf %254, %255 : vector<8x8xf32>
    %257 = vector.extract_strided_slice %153 {offsets = [24, 0], sizes = [8, 8], strides = [1, 1]} : vector<32x8xf32> to vector<8x8xf32>
    %258 = arith.addf %242, %146 : vector<8x8xf32>
    %259 = arith.mulf %249, %258 : vector<8x8xf32>
    %260 = arith.addf %257, %259 : vector<8x8xf32>
    %261 = math.tanh %260 : vector<8x8xf32>
    %cst_65 = arith.constant 1.000000e+00 : f32
    %262 = vector.broadcast %cst_65 : f32 to vector<8x8xf32>
    %263 = arith.subf %262, %256 : vector<8x8xf32>
    %264 = arith.mulf %263, %261 : vector<8x8xf32>
    %265 = arith.mulf %256, %238 : vector<8x8xf32>
    %266 = arith.addf %264, %265 : vector<8x8xf32>
    %267 = arith.mulf %266, %182 : vector<8x8xf32>
    %cst_66 = arith.constant dense<0.000000e+00> : vector<8xf32>
    %268 = vector.multi_reduction <add>, %267, %cst_66 [1] : vector<8x8xf32> to vector<8xf32>
    %269 = vector.shape_cast %268 : vector<8xf32> to vector<8x1xf32>
    %cst_67 = arith.constant 0.353553385 : f32
    %270 = vector.broadcast %cst_67 : f32 to vector<8x1xf32>
    %271 = arith.mulf %269, %270 : vector<8x1xf32>
    %272 = arith.mulf %266, %210 : vector<8x8xf32>
    %cst_68 = arith.constant dense<0.000000e+00> : vector<8xf32>
    %273 = vector.multi_reduction <add>, %272, %cst_68 [1] : vector<8x8xf32> to vector<8xf32>
    %274 = vector.shape_cast %273 : vector<8xf32> to vector<8x1xf32>
    %cst_69 = arith.constant 0.353553385 : f32
    %275 = vector.broadcast %cst_69 : f32 to vector<8x1xf32>
    %276 = arith.mulf %274, %275 : vector<8x1xf32>
    %277 = arith.mulf %266, %238 : vector<8x8xf32>
    %cst_70 = arith.constant dense<0.000000e+00> : vector<8xf32>
    %278 = vector.multi_reduction <add>, %277, %cst_70 [1] : vector<8x8xf32> to vector<8xf32>
    %279 = vector.shape_cast %278 : vector<8xf32> to vector<8x1xf32>
    %cst_71 = arith.constant 0.353553385 : f32
    %280 = vector.broadcast %cst_71 : f32 to vector<8x1xf32>
    %281 = arith.mulf %279, %280 : vector<8x1xf32>
    %282 = arith.mulf %266, %266 : vector<8x8xf32>
    %cst_72 = arith.constant dense<0.000000e+00> : vector<8xf32>
    %283 = vector.multi_reduction <add>, %282, %cst_72 [1] : vector<8x8xf32> to vector<8xf32>
    %284 = vector.shape_cast %283 : vector<8xf32> to vector<8x1xf32>
    %cst_73 = arith.constant 0.353553385 : f32
    %285 = vector.broadcast %cst_73 : f32 to vector<8x1xf32>
    %286 = arith.mulf %284, %285 : vector<8x1xf32>
    %287 = arith.maximumf %271, %276 : vector<8x1xf32>
    %288 = arith.maximumf %287, %281 : vector<8x1xf32>
    %289 = arith.maximumf %288, %286 : vector<8x1xf32>
    %290 = arith.subf %271, %289 : vector<8x1xf32>
    %291 = math.exp %290 : vector<8x1xf32>
    %292 = arith.subf %276, %289 : vector<8x1xf32>
    %293 = math.exp %292 : vector<8x1xf32>
    %294 = arith.subf %281, %289 : vector<8x1xf32>
    %295 = math.exp %294 : vector<8x1xf32>
    %296 = arith.subf %286, %289 : vector<8x1xf32>
    %297 = math.exp %296 : vector<8x1xf32>
    %298 = vector.broadcast %291 : vector<8x1xf32> to vector<8x8xf32>
    %299 = arith.mulf %298, %182 : vector<8x8xf32>
    %300 = arith.addf %291, %293 : vector<8x1xf32>
    %301 = vector.broadcast %293 : vector<8x1xf32> to vector<8x8xf32>
    %302 = arith.mulf %301, %210 : vector<8x8xf32>
    %303 = arith.addf %299, %302 : vector<8x8xf32>
    %304 = arith.addf %300, %295 : vector<8x1xf32>
    %305 = vector.broadcast %295 : vector<8x1xf32> to vector<8x8xf32>
    %306 = arith.mulf %305, %238 : vector<8x8xf32>
    %307 = arith.addf %303, %306 : vector<8x8xf32>
    %308 = arith.addf %304, %297 : vector<8x1xf32>
    %309 = vector.broadcast %297 : vector<8x1xf32> to vector<8x8xf32>
    %310 = arith.mulf %309, %266 : vector<8x8xf32>
    %311 = arith.addf %307, %310 : vector<8x8xf32>
    %312 = vector.broadcast %308 : vector<8x1xf32> to vector<8x8xf32>
    %313 = arith.divf %311, %312 : vector<8x8xf32>
    %314 = vector.extract_strided_slice %313 {offsets = [0, 0], sizes = [2, 8], strides = [1, 1]} : vector<8x8xf32> to vector<2x8xf32>
    %315 = vector.extract_strided_slice %313 {offsets = [2, 0], sizes = [2, 8], strides = [1, 1]} : vector<8x8xf32> to vector<2x8xf32>
    %316 = vector.extract_strided_slice %313 {offsets = [4, 0], sizes = [2, 8], strides = [1, 1]} : vector<8x8xf32> to vector<2x8xf32>
    %317 = tpu.concatenate %314, %315, %316 in 1 : vector<2x8xf32>, vector<2x8xf32>, vector<2x8xf32> -> vector<2x24xf32>
    %cst_74 = arith.constant 0.000000e+00 : f32
    %318 = vector.broadcast %cst_74 : f32 to vector<6x24xf32>
    %319 = tpu.concatenate %317, %318 in 0 : vector<2x24xf32>, vector<6x24xf32> -> vector<8x24xf32>
    %c104 = arith.constant 104 : index
    %c0_75 = arith.constant 0 : index
    %320 = vector.load %arg2[%c104, %c0_75] : memref<168x128xf32, #tpu.memory_space<vmem>>, vector<24x24xf32>
    %321 = arith.truncf %320 : vector<24x24xf32> to vector<24x24xbf16>
    %c128 = arith.constant 128 : index
    %c0_76 = arith.constant 0 : index
    %322 = vector.load %arg2[%c128, %c0_76] : memref<168x128xf32, #tpu.memory_space<vmem>>, vector<1x24xf32>
    %323 = arith.truncf %319 : vector<8x24xf32> to vector<8x24xbf16>
    %cst_77 = arith.constant dense<0.000000e+00> : vector<8x24xf32>
    %324 = tpu.matmul %323, %321, %cst_77 {dimension_numbers = #tpu.dot_dimension_numbers<[1], [0], [0], [1], [0, 0, 1, 1], [], []>} : vector<8x24xbf16>, vector<24x24xbf16>, vector<8x24xf32> -> vector<8x24xf32>
    %325 = vector.broadcast %322 : vector<1x24xf32> to vector<8x24xf32>
    %326 = arith.addf %324, %325 : vector<8x24xf32>
    %c136 = arith.constant 136 : index
    %c0_78 = arith.constant 0 : index
    %327 = vector.load %arg2[%c136, %c0_78] : memref<168x128xf32, #tpu.memory_space<vmem>>, vector<24x128xf32>
    %328 = arith.truncf %327 : vector<24x128xf32> to vector<24x128xbf16>
    %c160 = arith.constant 160 : index
    %c0_79 = arith.constant 0 : index
    %329 = vector.load %arg2[%c160, %c0_79] : memref<168x128xf32, #tpu.memory_space<vmem>>, vector<1x128xf32>
    %330 = arith.truncf %326 : vector<8x24xf32> to vector<8x24xbf16>
    %cst_80 = arith.constant dense<0.000000e+00> : vector<8x128xf32>
    %331 = tpu.matmul %330, %328, %cst_80 {dimension_numbers = #tpu.dot_dimension_numbers<[1], [0], [0], [1], [0, 0, 1, 1], [], []>} : vector<8x24xbf16>, vector<24x128xbf16>, vector<8x128xf32> -> vector<8x128xf32>
    %332 = vector.broadcast %329 : vector<1x128xf32> to vector<8x128xf32>
    %333 = arith.addf %331, %332 : vector<8x128xf32>
    %c0_81 = arith.constant 0 : index
    %c0_82 = arith.constant 0 : index
    %c0_83 = arith.constant 0 : index
    %334 = vector.load %arg3[%c0_81, %c0_82, %c0_83] : memref<1x8x128xf32, #tpu.memory_space<vmem>>, vector<1x8x128xf32>
    %335 = vector.shape_cast %334 : vector<1x8x128xf32> to vector<8x128xf32>
    %336 = vector.shape_cast %333 : vector<8x128xf32> to vector<1x8x128xf32>
    tpu.vector_store %arg3[%c0_81, %c0_82, %c0_83], %336 {strides = array<i32>} : memref<1x8x128xf32, #tpu.memory_space<vmem>>, vector<1x8x128xf32>,
    return
  }
  func.func @transform_0(%arg0: i32) -> (i32, i32, i32) {
    %c0_i32 = arith.constant 0 : i32
    %c0_i32_0 = arith.constant 0 : i32
    %c0_i32_1 = arith.constant 0 : i32
    return %arg0, %c0_i32, %c0_i32_0 : i32, i32, i32
  }
  func.func @transform_1(%arg0: i32) -> (i32, i32) {
    %c0_i32 = arith.constant 0 : i32
    %c0_i32_0 = arith.constant 0 : i32
    %c0_i32_1 = arith.constant 0 : i32
    return %c0_i32, %c0_i32_0 : i32, i32
  }
  func.func @transform_2(%arg0: i32) -> (i32, i32, i32) {
    %c0_i32 = arith.constant 0 : i32
    %c0_i32_0 = arith.constant 0 : i32
    %c0_i32_1 = arith.constant 0 : i32
    return %arg0, %c0_i32, %c0_i32_0 : i32, i32, i32
  }
}

</mosaic_0001>

<llo_original>
// kernel: forward.1
$region0: #{forward.1}
  #allocation0 [shape = 'u32[]', space=smem, size = 0x4, offset = 0x4, fixed_abs, tag = 'smem constant byte address 0x4 - core index']
  #allocation1 [shape = 'u32[144,128]{1,0:T(1,128)}', space=vmem, size = 0x12000, scoped, tag = 'internal scratch']
  %s0 = inlined_call_operand.vmem [shape: f32[8,32,128], index: 0, kind: input, shape index: {}]
  %s1 = inlined_call_operand.vmem [shape: f32[168,128], index: 1, kind: input, shape index: {}]
  %s2 = inlined_call_operand.vmem [shape: f32[8,8,128], index: 2, kind: output, shape index: {}]
  %s3 = sld [smem:[#allocation0]]
  $region41: #{forward.1} parent=0
    _
  %s5 = ssub.s32 1, %s3
  %s6 = scalar_select 0, %s5, %s3
  loop: start=0, step=1, limit=10
  $region2: #{forward.1} parent=0 // loop_pre_header
    _
  $region3: #{forward.1} parent=0 // loop_header
    %s8 = sphi 0, %s12
    %p9 = scmp.ge.s32.totalorder %s8, 10
    %s18 = sphi 0, %s20
    %s21 = sphi 0, %s18
    %s22 = sphi 0, %s21
    %s38 = sphi 0, %s22
    %s42 = sphi 0, %s42
    %s44 = sphi 0, %s42
    %s45 = sphi 0, %s44
    %s59 = sphi 0, %s45
    %s65 = sphi 0, %s67
    %s68 = sphi 0, %s65
    %s69 = sphi 0, %s68
    %s85 = sphi 0, %s69
  $region4: #{forward.1} parent=0 // loop_header_branch
    %11 = sbr.rel (%p9) target = $region8
  $region5: #{forward.1} parent=0 // loop_body
    %s13 = ssub.s32 %s8, 1
    %s14 = ssub.s32 %s8, 2
    %s15 = sadd.s32 %s8, 1
    %s16 = ssub.s32 %s8, %s15
    %p17 = scmp.eq.s32.totalorder %s16, 0
    %s19 = sadd.s32 %s18, 1
    %s20 = scalar_select %p17, %s18, %s19
    %p23 = pneg %p17
    %p24 = scmp.eq.s32.totalorder %s8, 7
    %p25 = por %p23, %p24
    %p26 = scmp.ne.s32.totalorder %s18, %s21
    %p27 = scmp.eq.s32.totalorder %s8, 0
    %p28 = por %p26, %p27
    %p29 = scmp.ne.s32.totalorder %s18, %s21
    %p30 = scmp.eq.s32.totalorder %s13, 7
    %p31 = por %p29, %p30
    %p32 = scmp.ne.s32.totalorder %s21, %s22
    %p33 = scmp.eq.s32.totalorder %s13, 0
    %p34 = por %p32, %p33
    %p35 = scmp.ne.s32.totalorder %s21, %s22
    %p36 = scmp.eq.s32.totalorder %s14, 7
    %p37 = por %p35, %p36
    %p39 = scmp.ne.s32.totalorder %s22, %s38
    %p40 = scmp.eq.s32.totalorder %s14, 0
    %p41 = por %p39, %p40
    %s43 = sadd.s32 %s42, 1
    %p46 = scmp.eq.s32.totalorder %s8, 7
    %p47 = scmp.ne.s32.totalorder %s42, %s44
    %p48 = scmp.eq.s32.totalorder %s8, 0
    %p49 = por %p47, %p48
    %p50 = scmp.ne.s32.totalorder %s42, %s44
    %p51 = scmp.eq.s32.totalorder %s13, 7
    %p52 = por %p50, %p51
    %p53 = scmp.ne.s32.totalorder %s44, %s45
    %p54 = scmp.eq.s32.totalorder %s13, 0
    %p55 = por %p53, %p54
    %p56 = scmp.ne.s32.totalorder %s44, %s45
    %p57 = scmp.eq.s32.totalorder %s14, 7
    %p58 = por %p56, %p57
    %p60 = scmp.ne.s32.totalorder %s45, %s59
    %p61 = scmp.eq.s32.totalorder %s14, 0
    %p62 = por %p60, %p61
    %s63 = ssub.s32 %s8, %s15
    %p64 = scmp.eq.s32.totalorder %s63, 0
    %s66 = sadd.s32 %s65, 1
    %s67 = scalar_select %p64, %s65, %s66
    %p70 = pneg %p64
    %p71 = scmp.eq.s32.totalorder %s8, 7
    %p72 = por %p70, %p71
    %p73 = scmp.ne.s32.totalorder %s65, %s68
    %p74 = scmp.eq.s32.totalorder %s8, 0
    %p75 = por %p73, %p74
    %p76 = scmp.ne.s32.totalorder %s65, %s68
    %p77 = scmp.eq.s32.totalorder %s13, 7
    %p78 = por %p76, %p77
    %p79 = scmp.ne.s32.totalorder %s68, %s69
    %p80 = scmp.eq.s32.totalorder %s13, 0
    %p81 = por %p79, %p80
    %p82 = scmp.ne.s32.totalorder %s68, %s69
    %p83 = scmp.eq.s32.totalorder %s14, 7
    %p84 = por %p82, %p83
    %p86 = scmp.ne.s32.totalorder %s69, %s85
    %p87 = scmp.eq.s32.totalorder %s14, 0
    %p88 = por %p86, %p87
    %p89 = scmp.le.s32.totalorder 1, %s8
    %p90 = scmp.lt.s32.totalorder %s8, 9
    %p91 = pnand %p89, %p90
    %p92 = pneg %p91
    // Predicated region
    $region9: #{forward.1} parent=5 // pred_check
      _
    $region10: #{forward.1} parent=5 // pred_check_branch
      %94 = sbr.rel (%p91) target = $region12
    $region11: #{forward.1} parent=5 // pred_region
      %s95 = ssub.s32 %s8, 1
      // Predicated region
      $region13: #{forward.1} parent=11 // pred_check
        %p96 = pneg %p55
      $region14: #{forward.1} parent=11 // pred_check_branch
        %98 = sbr.rel (%p96) target = $region16
      $region15: #{forward.1} parent=11 // pred_region
        _
      $region16: #{forward.1} parent=11 // pred_fallthru
        _
    $region12: #{forward.1} parent=5 // pred_fallthru
      _
    %p99 = scmp.lt.s32.totalorder %s8, 8
    // Predicated region
    $region17: #{forward.1} parent=5 // pred_check
      %p100 = pneg %p99
    $region18: #{forward.1} parent=5 // pred_check_branch
      %102 = sbr.rel (%p100) target = $region20
    $region19: #{forward.1} parent=5 // pred_region
      // Predicated region
      $region21: #{forward.1} parent=19 // pred_check
        %p103 = pneg %p28
      $region22: #{forward.1} parent=19 // pred_check_branch
        %105 = sbr.rel (%p103) target = $region24
      $region23: #{forward.1} parent=19 // pred_region
        %p106 = scmp.lt.s32.totalorder %s8, 7
        %s107 = scalar_select %p106, %s8, 7
        %s108 = smul.addr %s107, 4
        %s109 = smul.addr %s108, 8
        %s110 = scalar_lea.vmem %s0, %s109
      $region24: #{forward.1} parent=19 // pred_fallthru
        _
    $region20: #{forward.1} parent=5 // pred_fallthru
      _
    %p111 = scmp.le.s32.totalorder 1, %s8
    %p112 = scmp.lt.s32.totalorder %s8, 9
    %p113 = pnand %p111, %p112
    %p114 = pneg %p113
    // Predicated region
    $region25: #{forward.1} parent=5 // pred_check
      _
    $region26: #{forward.1} parent=5 // pred_check_branch
      %116 = sbr.rel (%p113) target = $region28
    $region27: #{forward.1} parent=5 // pred_region
      %s117 = ssub.s32 %s8, 1
      %p118 = scmp.lt.s32.totalorder %s13, 7
      %s119 = scalar_select %p118, %s13, 7
      %s120 = smul.addr %s119, 4
      %s121 = smul.addr %s120, 8
      %s122 = scalar_lea.vmem %s0, %s121
      %p123 = pneg %p34
      %p124 = pneg %p31
      %p125 = pneg %p55
      %p126 = pneg %p52
      %p127 = pneg %p81
      %p128 = pneg %p78
      %p129 = scmp.lt.s32.totalorder %s13, 7
      %s130 = scalar_select %p129, %s13, 7
      %s131 = smul.addr %s130, 8
      %s132 = scalar_lea.vmem %s2, %s131
      %p133 = scmp.lt.s32.totalorder %s13, 7
      %s134 = scalar_select %p133, %s13, 7
      %s135 = smul.addr %s134, 4
      %s136 = smul.addr %s135, 8
      %s137 = scalar_lea.vmem %s0, %s136
      %p138 = scmp.lt.s32.totalorder %s13, 7
      %s139 = scalar_select %p138, %s13, 7
      %s140 = smul.addr %s139, 8
      %s141 = scalar_lea.vmem %s2, %s140
      %v143 = vld [vmem:[%s137] sm:$0xff]
      %v144 = vld [vmem:[%s137 + $0x8] sm:$0xff]
      %v145 = vld [vmem:[%s137 + $0x10] sm:$0xff]
      %v146 = vld [vmem:[%s137 + $0x18] sm:$0xff]
      %v147 = vld [vmem:[%s1] sm:$0xff]
      %v148 = vld [vmem:[%s1 + $0x8] sm:$0x3]
      %v149 = vpack.c.bf16 %v148, %v147
      %v150 = vld [vmem:[%s1 + $0x10] sm:$0x1]
      %v151 = vld [vmem:[%s1 + $0x18] sm:$0xff]
      %v152 = vpack.c.bf16 %v151, %v151
      %v153 = vld [vmem:[%s1 + $0x20] sm:$0xff]
      %v154 = vpack.c.bf16 %v153, %v153
      %v155 = vld [vmem:[%s1 + $0x28] sm:$0xff]
      %v156 = vpack.c.bf16 %v155, %v155
      %v157 = vld [vmem:[%s1 + $0x30] sm:$0x1]
      %v158 = vlaneseq
      %v159 = vshrl.u32 %v158, 7
      %v160 = vsub.s32 0, %v159
      %v161 = vrot.slane %v157, %v160
      %v162 = vpack.c.bf16 %v144, %v143
      %v163 = vpack.c.bf16 %v146, %v145
      %v164 = vlaneseq
      %v165 = vshrl.u32 %v164, 7
      %v166 = vsub.s32 0, %v165
      %v167 = vrot.slane %v150, %v166
      %vm168 = vcmask 80896
      %v170 = vsel %vm168, %v162, 0
      %v173 = vsel %vm168, %v163, 0
      %vm175 = vcmask 1044480
      %v177 = vsel %vm175, %v149, 0
      %179 = vmatprep.subr.bf16.mxu0 0
      %180 = vmatpush1.bf16.msra.mxu0 %v177
      %181 = vmatprep.subr.bf16.mxu0 0
      %182 = vmatpush1.bf16.msra.mxu0 0
      %183 = vmatprep.subr.bf16.mxu0 0
      %184 = vmatpush1.bf16.msra.mxu0 0
      %185 = vmatprep.subr.bf16.mxu0 0
      %186 = vmatpush1.bf16.msra.mxu0 0
      %187 = vmatprep.subr.bf16.mxu0 0
      %188 = vmatpush1.bf16.msra.mxu0 0
      %189 = vmatprep.subr.bf16.mxu0 0
      %190 = vmatpush1.bf16.msra.mxu0 0
      %191 = vmatprep.subr.bf16.mxu0 0
      %192 = vmatpush1.bf16.msra.mxu0 0
      %193 = vmatprep.subr.bf16.mxu0 0
      %194 = vmatpush1.bf16.msra.mxu0 0
      %195 = vmatprep.subr.bf16.mxu0 0
      %196 = vmatpush1.bf16.msra.mxu0 0
      %197 = vmatprep.subr.bf16.mxu0 0
      %198 = vmatpush1.bf16.msra.mxu0 0
      %199 = vmatprep.subr.bf16.mxu0 0
      %200 = vmatpush1.bf16.msra.mxu0 0
      %201 = vmatprep.subr.bf16.mxu0 0
      %202 = vmatpush1.bf16.msra.mxu0 0
      %203 = vmatprep.subr.bf16.mxu0 0
      %204 = vmatpush1.bf16.msra.mxu0 0
      %205 = vmatprep.subr.bf16.mxu0 0
      %206 = vmatpush1.bf16.msra.mxu0 0
      %207 = vmatprep.subr.bf16.mxu0 0
      %208 = vmatpush1.bf16.msra.mxu0 0
      %209 = vmatprep.subr.bf16.mxu0 0
      %210 = vmatpush1.bf16.msra.mxu0 0
      %211 = vmatprep.mubr.bf16.mxu0 0
      %212 = vmatmul.mubr.bf16.gmra.mrb[0].mxu0 %v170
      %v213 = vpop.f32.mrb[0].mxu0
      %v214 = vadd.f32 %v167, %v213
      %v215 = vpop.f32.mrb[0].mxu0
      %v216 = vpop.f32.mrb[0].mxu0
      %v217 = vadd.f32 %v167, %v216
      %v218 = vpop.f32.mrb[0].mxu0
      %219 = vmatprep.mubr.bf16.mxu0 0
      %220 = vmatmul.mubr.bf16.gmra.mrb[0].mxu0 %v173
      %v221 = vpop.f32.mrb[0].mxu0
      %v222 = vadd.f32 %v167, %v221
      %v223 = vpop.f32.mrb[0].mxu0
      %v224 = vpop.f32.mrb[0].mxu0
      %v225 = vadd.f32 %v167, %v224
      %v226 = vpop.f32.mrb[0].mxu0
      %227 = vdwg.mxu0
      %vm228 = vcmask 64512
      %v230 = vsel %vm228, 0, 0
      %vm232 = vcmask 1043456
      %v234 = vsel %vm232, %v152, 0
      %236 = vmatprep.subr.bf16.mxu0 0
      %237 = vmatpush1.bf16.msra.mxu0 %v234
      %238 = vmatprep.subr.bf16.mxu0 0
      %239 = vmatpush1.bf16.msra.mxu0 0
      %240 = vmatprep.subr.bf16.mxu0 0
      %241 = vmatpush1.bf16.msra.mxu0 0
      %242 = vmatprep.subr.bf16.mxu0 0
      %243 = vmatpush1.bf16.msra.mxu0 0
      %244 = vmatprep.subr.bf16.mxu0 0
      %245 = vmatpush1.bf16.msra.mxu0 0
      %246 = vmatprep.subr.bf16.mxu0 0
      %247 = vmatpush1.bf16.msra.mxu0 0
      %248 = vmatprep.subr.bf16.mxu0 0
      %249 = vmatpush1.bf16.msra.mxu0 0
      %250 = vmatprep.subr.bf16.mxu0 0
      %251 = vmatpush1.bf16.msra.mxu0 0
      %252 = vmatprep.subr.bf16.mxu0 0
      %253 = vmatpush1.bf16.msra.mxu0 0
      %254 = vmatprep.subr.bf16.mxu0 0
      %255 = vmatpush1.bf16.msra.mxu0 0
      %256 = vmatprep.subr.bf16.mxu0 0
      %257 = vmatpush1.bf16.msra.mxu0 0
      %258 = vmatprep.subr.bf16.mxu0 0
      %259 = vmatpush1.bf16.msra.mxu0 0
      %260 = vmatprep.subr.bf16.mxu0 0
      %261 = vmatpush1.bf16.msra.mxu0 0
      %262 = vmatprep.subr.bf16.mxu0 0
      %263 = vmatpush1.bf16.msra.mxu0 0
      %264 = vmatprep.subr.bf16.mxu0 0
      %265 = vmatpush1.bf16.msra.mxu0 0
      %266 = vmatprep.subr.bf16.mxu0 0
      %267 = vmatpush1.bf16.msra.mxu0 0
      %268 = vmatprep.mubr.bf16.mxu0 0
      %269 = vmatmul.mubr.bf16.gmra.mrb[0].mxu0 %v230
      %v270 = vpop.f32.mrb[0].mxu0
      %v271 = vadd.f32 0.0, %v270
      %v272 = vpop.f32.mrb[0].mxu0
      %v273 = vpop.f32.mrb[0].mxu0
      %v274 = vpop.f32.mrb[0].mxu0
      %275 = vdwg.mxu0
      %v277 = vsel %vm232, %v154, 0
      %279 = vmatprep.subr.bf16.mxu0 0
      %280 = vmatpush1.bf16.msra.mxu0 %v277
      %281 = vmatprep.subr.bf16.mxu0 0
      %282 = vmatpush1.bf16.msra.mxu0 0
      %283 = vmatprep.subr.bf16.mxu0 0
      %284 = vmatpush1.bf16.msra.mxu0 0
      %285 = vmatprep.subr.bf16.mxu0 0
      %286 = vmatpush1.bf16.msra.mxu0 0
      %287 = vmatprep.subr.bf16.mxu0 0
      %288 = vmatpush1.bf16.msra.mxu0 0
      %289 = vmatprep.subr.bf16.mxu0 0
      %290 = vmatpush1.bf16.msra.mxu0 0
      %291 = vmatprep.subr.bf16.mxu0 0
      %292 = vmatpush1.bf16.msra.mxu0 0
      %293 = vmatprep.subr.bf16.mxu0 0
      %294 = vmatpush1.bf16.msra.mxu0 0
      %295 = vmatprep.subr.bf16.mxu0 0
      %296 = vmatpush1.bf16.msra.mxu0 0
      %297 = vmatprep.subr.bf16.mxu0 0
      %298 = vmatpush1.bf16.msra.mxu0 0
      %299 = vmatprep.subr.bf16.mxu0 0
      %300 = vmatpush1.bf16.msra.mxu0 0
      %301 = vmatprep.subr.bf16.mxu0 0
      %302 = vmatpush1.bf16.msra.mxu0 0
      %303 = vmatprep.subr.bf16.mxu0 0
      %304 = vmatpush1.bf16.msra.mxu0 0
      %305 = vmatprep.subr.bf16.mxu0 0
      %306 = vmatpush1.bf16.msra.mxu0 0
      %307 = vmatprep.subr.bf16.mxu0 0
      %308 = vmatpush1.bf16.msra.mxu0 0
      %309 = vmatprep.subr.bf16.mxu0 0
      %310 = vmatpush1.bf16.msra.mxu0 0
      %311 = vmatprep.mubr.bf16.mxu0 0
      %312 = vmatmul.mubr.bf16.gmra.mrb[0].mxu0 %v230
      %v313 = vpop.f32.mrb[0].mxu0
      %v314 = vadd.f32 0.0, %v313
      %v315 = vpop.f32.mrb[0].mxu0
      %v316 = vpop.f32.mrb[0].mxu0
      %v317 = vpop.f32.mrb[0].mxu0
      %318 = vdwg.mxu0
      %v319 = vadd.f32 %v214, %v271
      %v320 = vxor.u32 %v319, 2147483648
      %v321 = vmul.f32 %v320, 1.442695
      %v322 = vpow.pop %v321
      %v323 = vadd.f32 %v322, 1.0
      %v324 = vrcp.pop %v323
      %v325 = vmul.f32 1.0, %v324
      %327 = vrot.lane.b32.xlu0 %v314, 8
      %v328 = vpop.permute.xlu0 %327
      %v330 = vadd.f32 %v214, %v328
      %v331 = vxor.u32 %v330, 2147483648
      %v332 = vmul.f32 %v331, 1.442695
      %v333 = vpow.pop %v332
      %v334 = vadd.f32 %v333, 1.0
      %v335 = vrcp.pop %v334
      %v336 = vmul.f32 1.0, %v335
      %v338 = vsel %vm232, %v156, 0
      %340 = vmatprep.subr.bf16.mxu0 0
      %341 = vmatpush1.bf16.msra.mxu0 %v338
      %342 = vmatprep.subr.bf16.mxu0 0
      %343 = vmatpush1.bf16.msra.mxu0 0
      %344 = vmatprep.subr.bf16.mxu0 0
      %345 = vmatpush1.bf16.msra.mxu0 0
      %346 = vmatprep.subr.bf16.mxu0 0
      %347 = vmatpush1.bf16.msra.mxu0 0
      %348 = vmatprep.subr.bf16.mxu0 0
      %349 = vmatpush1.bf16.msra.mxu0 0
      %350 = vmatprep.subr.bf16.mxu0 0
      %351 = vmatpush1.bf16.msra.mxu0 0
      %352 = vmatprep.subr.bf16.mxu0 0
      %353 = vmatpush1.bf16.msra.mxu0 0
      %354 = vmatprep.subr.bf16.mxu0 0
      %355 = vmatpush1.bf16.msra.mxu0 0
      %356 = vmatprep.subr.bf16.mxu0 0
      %357 = vmatpush1.bf16.msra.mxu0 0
      %358 = vmatprep.subr.bf16.mxu0 0
      %359 = vmatpush1.bf16.msra.mxu0 0
      %360 = vmatprep.subr.bf16.mxu0 0
      %361 = vmatpush1.bf16.msra.mxu0 0
      %362 = vmatprep.subr.bf16.mxu0 0
      %363 = vmatpush1.bf16.msra.mxu0 0
      %364 = vmatprep.subr.bf16.mxu0 0
      %365 = vmatpush1.bf16.msra.mxu0 0
      %366 = vmatprep.subr.bf16.mxu0 0
      %367 = vmatpush1.bf16.msra.mxu0 0
      %368 = vmatprep.subr.bf16.mxu0 0
      %369 = vmatpush1.bf16.msra.mxu0 0
      %370 = vmatprep.subr.bf16.mxu0 0
      %371 = vmatpush1.bf16.msra.mxu0 0
      %372 = vmatprep.mubr.bf16.mxu0 0
      %373 = vmatmul.mubr.bf16.gmra.mrb[0].mxu0 %v230
      %v374 = vpop.f32.mrb[0].mxu0
      %v375 = vadd.f32 %v161, %v374
      %v376 = vpop.f32.mrb[0].mxu0
      %v377 = vpop.f32.mrb[0].mxu0
      %v378 = vpop.f32.mrb[0].mxu0
      %379 = vdwg.mxu0
      %v380 = vmul.f32 %v325, %v375
      %382 = vrot.lane.b32.xlu0 %v380, 16
      %v383 = vpop.permute.xlu0 %382
      %v385 = vadd.f32 %v214, %v383
      %v386 = vtanh.pop %v385
      %v387 = vsub.f32 1.0, %v336
      %389 = vrot.lane.b32.xlu0 %v386, 120
      %v390 = vpop.permute.xlu0 %389
      %v392 = vmul.f32 %v387, %v390
      %v393 = vmul.f32 %v336, 0.0
      %v394 = vadd.f32 %v392, %v393
      %v395 = vpack.c.bf16 %v394, %v394
      %397 = vrot.lane.b32.xlu0 %v395, 120
      %v398 = vpop.permute.xlu0 %397
      %v400 = vsel %vm228, %v398, 0
      %402 = vmatprep.subr.bf16.mxu0 0
      %403 = vmatpush1.bf16.msra.mxu0 %v234
      %404 = vmatprep.subr.bf16.mxu0 0
      %405 = vmatpush1.bf16.msra.mxu0 0
      %406 = vmatprep.subr.bf16.mxu0 0
      %407 = vmatpush1.bf16.msra.mxu0 0
      %408 = vmatprep.subr.bf16.mxu0 0
      %409 = vmatpush1.bf16.msra.mxu0 0
      %410 = vmatprep.subr.bf16.mxu0 0
      %411 = vmatpush1.bf16.msra.mxu0 0
      %412 = vmatprep.subr.bf16.mxu0 0
      %413 = vmatpush1.bf16.msra.mxu0 0
      %414 = vmatprep.subr.bf16.mxu0 0
      %415 = vmatpush1.bf16.msra.mxu0 0
      %416 = vmatprep.subr.bf16.mxu0 0
      %417 = vmatpush1.bf16.msra.mxu0 0
      %418 = vmatprep.subr.bf16.mxu0 0
      %419 = vmatpush1.bf16.msra.mxu0 0
      %420 = vmatprep.subr.bf16.mxu0 0
      %421 = vmatpush1.bf16.msra.mxu0 0
      %422 = vmatprep.subr.bf16.mxu0 0
      %423 = vmatpush1.bf16.msra.mxu0 0
      %424 = vmatprep.subr.bf16.mxu0 0
      %425 = vmatpush1.bf16.msra.mxu0 0
      %426 = vmatprep.subr.bf16.mxu0 0
      %427 = vmatpush1.bf16.msra.mxu0 0
      %428 = vmatprep.subr.bf16.mxu0 0
      %429 = vmatpush1.bf16.msra.mxu0 0
      %430 = vmatprep.subr.bf16.mxu0 0
      %431 = vmatpush1.bf16.msra.mxu0 0
      %432 = vmatprep.subr.bf16.mxu0 0
      %433 = vmatpush1.bf16.msra.mxu0 0
      %434 = vmatprep.mubr.bf16.mxu0 0
      %435 = vmatmul.mubr.bf16.gmra.mrb[0].mxu0 %v400
      %v436 = vpop.f32.mrb[0].mxu0
      %v437 = vadd.f32 0.0, %v436
      %v438 = vpop.f32.mrb[0].mxu0
      %v439 = vpop.f32.mrb[0].mxu0
      %v440 = vpop.f32.mrb[0].mxu0
      %441 = vdwg.mxu0
      %442 = vmatprep.subr.bf16.mxu0 0
      %443 = vmatpush1.bf16.msra.mxu0 %v277
      %444 = vmatprep.subr.bf16.mxu0 0
      %445 = vmatpush1.bf16.msra.mxu0 0
      %446 = vmatprep.subr.bf16.mxu0 0
      %447 = vmatpush1.bf16.msra.mxu0 0
      %448 = vmatprep.subr.bf16.mxu0 0
      %449 = vmatpush1.bf16.msra.mxu0 0
      %450 = vmatprep.subr.bf16.mxu0 0
      %451 = vmatpush1.bf16.msra.mxu0 0
      %452 = vmatprep.subr.bf16.mxu0 0
      %453 = vmatpush1.bf16.msra.mxu0 0
      %454 = vmatprep.subr.bf16.mxu0 0
      %455 = vmatpush1.bf16.msra.mxu0 0
      %456 = vmatprep.subr.bf16.mxu0 0
      %457 = vmatpush1.bf16.msra.mxu0 0
      %458 = vmatprep.subr.bf16.mxu0 0
      %459 = vmatpush1.bf16.msra.mxu0 0
      %460 = vmatprep.subr.bf16.mxu0 0
      %461 = vmatpush1.bf16.msra.mxu0 0
      %462 = vmatprep.subr.bf16.mxu0 0
      %463 = vmatpush1.bf16.msra.mxu0 0
      %464 = vmatprep.subr.bf16.mxu0 0
      %465 = vmatpush1.bf16.msra.mxu0 0
      %466 = vmatprep.subr.bf16.mxu0 0
      %467 = vmatpush1.bf16.msra.mxu0 0
      %468 = vmatprep.subr.bf16.mxu0 0
      %469 = vmatpush1.bf16.msra.mxu0 0
      %470 = vmatprep.subr.bf16.mxu0 0
      %471 = vmatpush1.bf16.msra.mxu0 0
      %472 = vmatprep.subr.bf16.mxu0 0
      %473 = vmatpush1.bf16.msra.mxu0 0
      %474 = vmatprep.mubr.bf16.mxu0 0
      %475 = vmatmul.mubr.bf16.gmra.mrb[0].mxu0 %v400
      %v476 = vpop.f32.mrb[0].mxu0
      %v477 = vadd.f32 0.0, %v476
      %v478 = vpop.f32.mrb[0].mxu0
      %v479 = vpop.f32.mrb[0].mxu0
      %v480 = vpop.f32.mrb[0].mxu0
      %481 = vdwg.mxu0
      %v482 = vadd.f32 %v217, %v437
      %v483 = vxor.u32 %v482, 2147483648
      %v484 = vmul.f32 %v483, 1.442695
      %v485 = vpow.pop %v484
      %v486 = vadd.f32 %v485, 1.0
      %v487 = vrcp.pop %v486
      %v488 = vmul.f32 1.0, %v487
      %490 = vrot.lane.b32.xlu0 %v477, 8
      %v491 = vpop.permute.xlu0 %490
      %v493 = vadd.f32 %v217, %v491
      %v494 = vxor.u32 %v493, 2147483648
      %v495 = vmul.f32 %v494, 1.442695
      %v496 = vpow.pop %v495
      %v497 = vadd.f32 %v496, 1.0
      %v498 = vrcp.pop %v497
      %v499 = vmul.f32 1.0, %v498
      %500 = vmatprep.subr.bf16.mxu0 0
      %501 = vmatpush1.bf16.msra.mxu0 %v338
      %502 = vmatprep.subr.bf16.mxu0 0
      %503 = vmatpush1.bf16.msra.mxu0 0
      %504 = vmatprep.subr.bf16.mxu0 0
      %505 = vmatpush1.bf16.msra.mxu0 0
      %506 = vmatprep.subr.bf16.mxu0 0
      %507 = vmatpush1.bf16.msra.mxu0 0
      %508 = vmatprep.subr.bf16.mxu0 0
      %509 = vmatpush1.bf16.msra.mxu0 0
      %510 = vmatprep.subr.bf16.mxu0 0
      %511 = vmatpush1.bf16.msra.mxu0 0
      %512 = vmatprep.subr.bf16.mxu0 0
      %513 = vmatpush1.bf16.msra.mxu0 0
      %514 = vmatprep.subr.bf16.mxu0 0
      %515 = vmatpush1.bf16.msra.mxu0 0
      %516 = vmatprep.subr.bf16.mxu0 0
      %517 = vmatpush1.bf16.msra.mxu0 0
      %518 = vmatprep.subr.bf16.mxu0 0
      %519 = vmatpush1.bf16.msra.mxu0 0
      %520 = vmatprep.subr.bf16.mxu0 0
      %521 = vmatpush1.bf16.msra.mxu0 0
      %522 = vmatprep.subr.bf16.mxu0 0
      %523 = vmatpush1.bf16.msra.mxu0 0
      %524 = vmatprep.subr.bf16.mxu0 0
      %525 = vmatpush1.bf16.msra.mxu0 0
      %526 = vmatprep.subr.bf16.mxu0 0
      %527 = vmatpush1.bf16.msra.mxu0 0
      %528 = vmatprep.subr.bf16.mxu0 0
      %529 = vmatpush1.bf16.msra.mxu0 0
      %530 = vmatprep.subr.bf16.mxu0 0
      %531 = vmatpush1.bf16.msra.mxu0 0
      %532 = vmatprep.mubr.bf16.mxu0 0
      %533 = vmatmul.mubr.bf16.gmra.mrb[0].mxu0 %v400
      %v534 = vpop.f32.mrb[0].mxu0
      %v535 = vadd.f32 %v161, %v534
      %v536 = vpop.f32.mrb[0].mxu0
      %v537 = vpop.f32.mrb[0].mxu0
      %v538 = vpop.f32.mrb[0].mxu0
      %539 = vdwg.mxu0
      %v540 = vmul.f32 %v488, %v535
      %542 = vrot.lane.b32.xlu0 %v540, 16
      %v543 = vpop.permute.xlu0 %542
      %v545 = vadd.f32 %v217, %v543
      %v546 = vtanh.pop %v545
      %v547 = vsub.f32 1.0, %v499
      %549 = vrot.lane.b32.xlu0 %v546, 120
      %v550 = vpop.permute.xlu0 %549
      %v552 = vmul.f32 %v547, %v550
      %v553 = vmul.f32 %v499, %v394
      %v554 = vadd.f32 %v552, %v553
      %v555 = vpack.c.bf16 %v554, %v554
      %557 = vrot.lane.b32.xlu0 %v555, 120
      %v558 = vpop.permute.xlu0 %557
      %v560 = vsel %vm228, %v558, 0
      %562 = vmatprep.subr.bf16.mxu0 0
      %563 = vmatpush1.bf16.msra.mxu0 %v234
      %564 = vmatprep.subr.bf16.mxu0 0
      %565 = vmatpush1.bf16.msra.mxu0 0
      %566 = vmatprep.subr.bf16.mxu0 0
      %567 = vmatpush1.bf16.msra.mxu0 0
      %568 = vmatprep.subr.bf16.mxu0 0
      %569 = vmatpush1.bf16.msra.mxu0 0
      %570 = vmatprep.subr.bf16.mxu0 0
      %571 = vmatpush1.bf16.msra.mxu0 0
      %572 = vmatprep.subr.bf16.mxu0 0
      %573 = vmatpush1.bf16.msra.mxu0 0
      %574 = vmatprep.subr.bf16.mxu0 0
      %575 = vmatpush1.bf16.msra.mxu0 0
      %576 = vmatprep.subr.bf16.mxu0 0
      %577 = vmatpush1.bf16.msra.mxu0 0
      %578 = vmatprep.subr.bf16.mxu0 0
      %579 = vmatpush1.bf16.msra.mxu0 0
      %580 = vmatprep.subr.bf16.mxu0 0
      %581 = vmatpush1.bf16.msra.mxu0 0
      %582 = vmatprep.subr.bf16.mxu0 0
      %583 = vmatpush1.bf16.msra.mxu0 0
      %584 = vmatprep.subr.bf16.mxu0 0
      %585 = vmatpush1.bf16.msra.mxu0 0
      %586 = vmatprep.subr.bf16.mxu0 0
      %587 = vmatpush1.bf16.msra.mxu0 0
      %588 = vmatprep.subr.bf16.mxu0 0
      %589 = vmatpush1.bf16.msra.mxu0 0
      %590 = vmatprep.subr.bf16.mxu0 0
      %591 = vmatpush1.bf16.msra.mxu0 0
      %592 = vmatprep.subr.bf16.mxu0 0
      %593 = vmatpush1.bf16.msra.mxu0 0
      %594 = vmatprep.mubr.bf16.mxu0 0
      %595 = vmatmul.mubr.bf16.gmra.mrb[0].mxu0 %v560
      %v596 = vpop.f32.mrb[0].mxu0
      %v597 = vadd.f32 0.0, %v596
      %v598 = vpop.f32.mrb[0].mxu0
      %v599 = vpop.f32.mrb[0].mxu0
      %v600 = vpop.f32.mrb[0].mxu0
      %601 = vdwg.mxu0
      %602 = vmatprep.subr.bf16.mxu0 0
      %603 = vmatpush1.bf16.msra.mxu0 %v277
      %604 = vmatprep.subr.bf16.mxu0 0
      %605 = vmatpush1.bf16.msra.mxu0 0
      %606 = vmatprep.subr.bf16.mxu0 0
      %607 = vmatpush1.bf16.msra.mxu0 0
      %608 = vmatprep.subr.bf16.mxu0 0
      %609 = vmatpush1.bf16.msra.mxu0 0
      %610 = vmatprep.subr.bf16.mxu0 0
      %611 = vmatpush1.bf16.msra.mxu0 0
      %612 = vmatprep.subr.bf16.mxu0 0
      %613 = vmatpush1.bf16.msra.mxu0 0
      %614 = vmatprep.subr.bf16.mxu0 0
      %615 = vmatpush1.bf16.msra.mxu0 0
      %616 = vmatprep.subr.bf16.mxu0 0
      %617 = vmatpush1.bf16.msra.mxu0 0
      %618 = vmatprep.subr.bf16.mxu0 0
      %619 = vmatpush1.bf16.msra.mxu0 0
      %620 = vmatprep.subr.bf16.mxu0 0
      %621 = vmatpush1.bf16.msra.mxu0 0
      %622 = vmatprep.subr.bf16.mxu0 0
      %623 = vmatpush1.bf16.msra.mxu0 0
      %624 = vmatprep.subr.bf16.mxu0 0
      %625 = vmatpush1.bf16.msra.mxu0 0
      %626 = vmatprep.subr.bf16.mxu0 0
      %627 = vmatpush1.bf16.msra.mxu0 0
      %628 = vmatprep.subr.bf16.mxu0 0
      %629 = vmatpush1.bf16.msra.mxu0 0
      %630 = vmatprep.subr.bf16.mxu0 0
      %631 = vmatpush1.bf16.msra.mxu0 0
      %632 = vmatprep.subr.bf16.mxu0 0
      %633 = vmatpush1.bf16.msra.mxu0 0
      %634 = vmatprep.mubr.bf16.mxu0 0
      %635 = vmatmul.mubr.bf16.gmra.mrb[0].mxu0 %v560
      %v636 = vpop.f32.mrb[0].mxu0
      %v637 = vadd.f32 0.0, %v636
      %v638 = vpop.f32.mrb[0].mxu0
      %v639 = vpop.f32.mrb[0].mxu0
      %v640 = vpop.f32.mrb[0].mxu0
      %641 = vdwg.mxu0
      %v642 = vadd.f32 %v222, %v597
      %v643 = vxor.u32 %v642, 2147483648
      %v644 = vmul.f32 %v643, 1.442695
      %v645 = vpow.pop %v644
      %v646 = vadd.f32 %v645, 1.0
      %v647 = vrcp.pop %v646
      %v648 = vmul.f32 1.0, %v647
      %650 = vrot.lane.b32.xlu0 %v637, 8
      %v651 = vpop.permute.xlu0 %650
      %v653 = vadd.f32 %v222, %v651
      %v654 = vxor.u32 %v653, 2147483648
      %v655 = vmul.f32 %v654, 1.442695
      %v656 = vpow.pop %v655
      %v657 = vadd.f32 %v656, 1.0
      %v658 = vrcp.pop %v657
      %v659 = vmul.f32 1.0, %v658
      %660 = vmatprep.subr.bf16.mxu0 0
      %661 = vmatpush1.bf16.msra.mxu0 %v338
      %662 = vmatprep.subr.bf16.mxu0 0
      %663 = vmatpush1.bf16.msra.mxu0 0
      %664 = vmatprep.subr.bf16.mxu0 0
      %665 = vmatpush1.bf16.msra.mxu0 0
      %666 = vmatprep.subr.bf16.mxu0 0
      %667 = vmatpush1.bf16.msra.mxu0 0
      %668 = vmatprep.subr.bf16.mxu0 0
      %669 = vmatpush1.bf16.msra.mxu0 0
      %670 = vmatprep.subr.bf16.mxu0 0
      %671 = vmatpush1.bf16.msra.mxu0 0
      %672 = vmatprep.subr.bf16.mxu0 0
      %673 = vmatpush1.bf16.msra.mxu0 0
      %674 = vmatprep.subr.bf16.mxu0 0
      %675 = vmatpush1.bf16.msra.mxu0 0
      %676 = vmatprep.subr.bf16.mxu0 0
      %677 = vmatpush1.bf16.msra.mxu0 0
      %678 = vmatprep.subr.bf16.mxu0 0
      %679 = vmatpush1.bf16.msra.mxu0 0
      %680 = vmatprep.subr.bf16.mxu0 0
      %681 = vmatpush1.bf16.msra.mxu0 0
      %682 = vmatprep.subr.bf16.mxu0 0
      %683 = vmatpush1.bf16.msra.mxu0 0
      %684 = vmatprep.subr.bf16.mxu0 0
      %685 = vmatpush1.bf16.msra.mxu0 0
      %686 = vmatprep.subr.bf16.mxu0 0
      %687 = vmatpush1.bf16.msra.mxu0 0
      %688 = vmatprep.subr.bf16.mxu0 0
      %689 = vmatpush1.bf16.msra.mxu0 0
      %690 = vmatprep.subr.bf16.mxu0 0
      %691 = vmatpush1.bf16.msra.mxu0 0
      %692 = vmatprep.mubr.bf16.mxu0 0
      %693 = vmatmul.mubr.bf16.gmra.mrb[0].mxu0 %v560
      %v694 = vpop.f32.mrb[0].mxu0
      %v695 = vadd.f32 %v161, %v694
      %v696 = vpop.f32.mrb[0].mxu0
      %v697 = vpop.f32.mrb[0].mxu0
      %v698 = vpop.f32.mrb[0].mxu0
      %699 = vdwg.mxu0
      %v700 = vmul.f32 %v648, %v695
      %702 = vrot.lane.b32.xlu0 %v700, 16
      %v703 = vpop.permute.xlu0 %702
      %v705 = vadd.f32 %v222, %v703
      %v706 = vtanh.pop %v705
      %v707 = vsub.f32 1.0, %v659
      %709 = vrot.lane.b32.xlu0 %v706, 120
      %v710 = vpop.permute.xlu0 %709
      %v712 = vmul.f32 %v707, %v710
      %v713 = vmul.f32 %v659, %v554
      %v714 = vadd.f32 %v712, %v713
      %v715 = vpack.c.bf16 %v714, %v714
      %717 = vrot.lane.b32.xlu0 %v715, 120
      %v718 = vpop.permute.xlu0 %717
      %v720 = vsel %vm228, %v718, 0
      %722 = vmatprep.subr.bf16.mxu0 0
      %723 = vmatpush1.bf16.msra.mxu0 %v234
      %724 = vmatprep.subr.bf16.mxu0 0
      %725 = vmatpush1.bf16.msra.mxu0 0
      %726 = vmatprep.subr.bf16.mxu0 0
      %727 = vmatpush1.bf16.msra.mxu0 0
      %728 = vmatprep.subr.bf16.mxu0 0
      %729 = vmatpush1.bf16.msra.mxu0 0
      %730 = vmatprep.subr.bf16.mxu0 0
      %731 = vmatpush1.bf16.msra.mxu0 0
      %732 = vmatprep.subr.bf16.mxu0 0
      %733 = vmatpush1.bf16.msra.mxu0 0
      %734 = vmatprep.subr.bf16.mxu0 0
      %735 = vmatpush1.bf16.msra.mxu0 0
      %736 = vmatprep.subr.bf16.mxu0 0
      %737 = vmatpush1.bf16.msra.mxu0 0
      %738 = vmatprep.subr.bf16.mxu0 0
      %739 = vmatpush1.bf16.msra.mxu0 0
      %740 = vmatprep.subr.bf16.mxu0 0
      %741 = vmatpush1.bf16.msra.mxu0 0
      %742 = vmatprep.subr.bf16.mxu0 0
      %743 = vmatpush1.bf16.msra.mxu0 0
      %744 = vmatprep.subr.bf16.mxu0 0
      %745 = vmatpush1.bf16.msra.mxu0 0
      %746 = vmatprep.subr.bf16.mxu0 0
      %747 = vmatpush1.bf16.msra.mxu0 0
      %748 = vmatprep.subr.bf16.mxu0 0
      %749 = vmatpush1.bf16.msra.mxu0 0
      %750 = vmatprep.subr.bf16.mxu0 0
      %751 = vmatpush1.bf16.msra.mxu0 0
      %752 = vmatprep.subr.bf16.mxu0 0
      %753 = vmatpush1.bf16.msra.mxu0 0
      %754 = vmatprep.mubr.bf16.mxu0 0
      %755 = vmatmul.mubr.bf16.gmra.mrb[0].mxu0 %v720
      %v756 = vpop.f32.mrb[0].mxu0
      %v757 = vadd.f32 0.0, %v756
      %v758 = vpop.f32.mrb[0].mxu0
      %v759 = vpop.f32.mrb[0].mxu0
      %v760 = vpop.f32.mrb[0].mxu0
      %761 = vdwg.mxu0
      %762 = vmatprep.subr.bf16.mxu0 0
      %763 = vmatpush1.bf16.msra.mxu0 %v277
      %764 = vmatprep.subr.bf16.mxu0 0
      %765 = vmatpush1.bf16.msra.mxu0 0
      %766 = vmatprep.subr.bf16.mxu0 0
      %767 = vmatpush1.bf16.msra.mxu0 0
      %768 = vmatprep.subr.bf16.mxu0 0
      %769 = vmatpush1.bf16.msra.mxu0 0
      %770 = vmatprep.subr.bf16.mxu0 0
      %771 = vmatpush1.bf16.msra.mxu0 0
      %772 = vmatprep.subr.bf16.mxu0 0
      %773 = vmatpush1.bf16.msra.mxu0 0
      %774 = vmatprep.subr.bf16.mxu0 0
      %775 = vmatpush1.bf16.msra.mxu0 0
      %776 = vmatprep.subr.bf16.mxu0 0
      %777 = vmatpush1.bf16.msra.mxu0 0
      %778 = vmatprep.subr.bf16.mxu0 0
      %779 = vmatpush1.bf16.msra.mxu0 0
      %780 = vmatprep.subr.bf16.mxu0 0
      %781 = vmatpush1.bf16.msra.mxu0 0
      %782 = vmatprep.subr.bf16.mxu0 0
      %783 = vmatpush1.bf16.msra.mxu0 0
      %784 = vmatprep.subr.bf16.mxu0 0
      %785 = vmatpush1.bf16.msra.mxu0 0
      %786 = vmatprep.subr.bf16.mxu0 0
      %787 = vmatpush1.bf16.msra.mxu0 0
      %788 = vmatprep.subr.bf16.mxu0 0
      %789 = vmatpush1.bf16.msra.mxu0 0
      %790 = vmatprep.subr.bf16.mxu0 0
      %791 = vmatpush1.bf16.msra.mxu0 0
      %792 = vmatprep.subr.bf16.mxu0 0
      %793 = vmatpush1.bf16.msra.mxu0 0
      %794 = vmatprep.mubr.bf16.mxu0 0
      %795 = vmatmul.mubr.bf16.gmra.mrb[0].mxu0 %v720
      %v796 = vpop.f32.mrb[0].mxu0
      %v797 = vadd.f32 0.0, %v796
      %v798 = vpop.f32.mrb[0].mxu0
      %v799 = vpop.f32.mrb[0].mxu0
      %v800 = vpop.f32.mrb[0].mxu0
      %801 = vdwg.mxu0
      %v802 = vadd.f32 %v225, %v757
      %v803 = vxor.u32 %v802, 2147483648
      %v804 = vmul.f32 %v803, 1.442695
      %v805 = vpow.pop %v804
      %v806 = vadd.f32 %v805, 1.0
      %v807 = vrcp.pop %v806
      %v808 = vmul.f32 1.0, %v807
      %810 = vrot.lane.b32.xlu0 %v797, 8
      %v811 = vpop.permute.xlu0 %810
      %v813 = vadd.f32 %v225, %v811
      %v814 = vxor.u32 %v813, 2147483648
      %v815 = vmul.f32 %v814, 1.442695
      %v816 = vpow.pop %v815
      %v817 = vadd.f32 %v816, 1.0
      %v818 = vrcp.pop %v817
      %v819 = vmul.f32 1.0, %v818
      %820 = vmatprep.subr.bf16.mxu0 0
      %821 = vmatpush1.bf16.msra.mxu0 %v338
      %822 = vmatprep.subr.bf16.mxu0 0
      %823 = vmatpush1.bf16.msra.mxu0 0
      %824 = vmatprep.subr.bf16.mxu0 0
      %825 = vmatpush1.bf16.msra.mxu0 0
      %826 = vmatprep.subr.bf16.mxu0 0
      %827 = vmatpush1.bf16.msra.mxu0 0
      %828 = vmatprep.subr.bf16.mxu0 0
      %829 = vmatpush1.bf16.msra.mxu0 0
      %830 = vmatprep.subr.bf16.mxu0 0
      %831 = vmatpush1.bf16.msra.mxu0 0
      %832 = vmatprep.subr.bf16.mxu0 0
      %833 = vmatpush1.bf16.msra.mxu0 0
      %834 = vmatprep.subr.bf16.mxu0 0
      %835 = vmatpush1.bf16.msra.mxu0 0
      %836 = vmatprep.subr.bf16.mxu0 0
      %837 = vmatpush1.bf16.msra.mxu0 0
      %838 = vmatprep.subr.bf16.mxu0 0
      %839 = vmatpush1.bf16.msra.mxu0 0
      %840 = vmatprep.subr.bf16.mxu0 0
      %841 = vmatpush1.bf16.msra.mxu0 0
      %842 = vmatprep.subr.bf16.mxu0 0
      %843 = vmatpush1.bf16.msra.mxu0 0
      %844 = vmatprep.subr.bf16.mxu0 0
      %845 = vmatpush1.bf16.msra.mxu0 0
      %846 = vmatprep.subr.bf16.mxu0 0
      %847 = vmatpush1.bf16.msra.mxu0 0
      %848 = vmatprep.subr.bf16.mxu0 0
      %849 = vmatpush1.bf16.msra.mxu0 0
      %850 = vmatprep.subr.bf16.mxu0 0
      %851 = vmatpush1.bf16.msra.mxu0 0
      %852 = vmatprep.mubr.bf16.mxu0 0
      %853 = vmatmul.mubr.bf16.gmra.mrb[0].mxu0 %v720
      %v854 = vpop.f32.mrb[0].mxu0
      %v855 = vadd.f32 %v161, %v854
      %v856 = vpop.f32.mrb[0].mxu0
      %v857 = vpop.f32.mrb[0].mxu0
      %v858 = vpop.f32.mrb[0].mxu0
      %859 = vdwg.mxu0
      %v860 = vmul.f32 %v808, %v855
      %862 = vrot.lane.b32.xlu0 %v860, 16
      %v863 = vpop.permute.xlu0 %862
      %v865 = vadd.f32 %v225, %v863
      %v866 = vtanh.pop %v865
      %v867 = vsub.f32 1.0, %v819
      %869 = vrot.lane.b32.xlu0 %v866, 120
      %v870 = vpop.permute.xlu0 %869
      %v872 = vmul.f32 %v867, %v870
      %v873 = vmul.f32 %v819, %v714
      %v874 = vadd.f32 %v872, %v873
      %v875 = vld [vmem:[%s1 + $0x38] sm:$0xff]
      %v876 = vpack.c.bf16 %v875, %v875
      %v877 = vld [vmem:[%s1 + $0x40] sm:$0x1]
      %v878 = vld [vmem:[%s1 + $0x48] sm:$0xff]
      %v879 = vpack.c.bf16 %v878, %v878
      %v880 = vld [vmem:[%s1 + $0x50] sm:$0xff]
      %v881 = vpack.c.bf16 %v880, %v880
      %v882 = vld [vmem:[%s1 + $0x58] sm:$0xff]
      %v883 = vpack.c.bf16 %v882, %v882
      %v884 = vld [vmem:[%s1 + $0x60] sm:$0x1]
      %v885 = vlaneseq
      %v886 = vshrl.u32 %v885, 7
      %v887 = vsub.s32 0, %v886
      %v888 = vrot.slane %v884, %v887
      %v889 = vpack.c.bf16 %v554, %v394
      %v890 = vpack.c.bf16 %v874, %v714
      %v891 = vlaneseq
      %v892 = vshrl.u32 %v891, 7
      %v893 = vsub.s32 0, %v892
      %v894 = vrot.slane %v877, %v893
      %897 = vrot.lane.b32.xlu0 %v889, 120
      %v898 = vpop.permute.xlu0 %897
      %899 = vrot.lane.b32.xlu0 %v890, 120
      %v900 = vpop.permute.xlu0 %899
      %v902 = vsel %vm228, %v898, 0
      %v905 = vsel %vm228, %v900, 0
      %v908 = vsel %vm232, %v876, 0
      %910 = vmatprep.subr.bf16.mxu0 0
      %911 = vmatpush1.bf16.msra.mxu0 %v908
      %912 = vmatprep.subr.bf16.mxu0 0
      %913 = vmatpush1.bf16.msra.mxu0 0
      %914 = vmatprep.subr.bf16.mxu0 0
      %915 = vmatpush1.bf16.msra.mxu0 0
      %916 = vmatprep.subr.bf16.mxu0 0
      %917 = vmatpush1.bf16.msra.mxu0 0
      %918 = vmatprep.subr.bf16.mxu0 0
      %919 = vmatpush1.bf16.msra.mxu0 0
      %920 = vmatprep.subr.bf16.mxu0 0
      %921 = vmatpush1.bf16.msra.mxu0 0
      %922 = vmatprep.subr.bf16.mxu0 0
      %923 = vmatpush1.bf16.msra.mxu0 0
      %924 = vmatprep.subr.bf16.mxu0 0
      %925 = vmatpush1.bf16.msra.mxu0 0
      %926 = vmatprep.subr.bf16.mxu0 0
      %927 = vmatpush1.bf16.msra.mxu0 0
      %928 = vmatprep.subr.bf16.mxu0 0
      %929 = vmatpush1.bf16.msra.mxu0 0
      %930 = vmatprep.subr.bf16.mxu0 0
      %931 = vmatpush1.bf16.msra.mxu0 0
      %932 = vmatprep.subr.bf16.mxu0 0
      %933 = vmatpush1.bf16.msra.mxu0 0
      %934 = vmatprep.subr.bf16.mxu0 0
      %935 = vmatpush1.bf16.msra.mxu0 0
      %936 = vmatprep.subr.bf16.mxu0 0
      %937 = vmatpush1.bf16.msra.mxu0 0
      %938 = vmatprep.subr.bf16.mxu0 0
      %939 = vmatpush1.bf16.msra.mxu0 0
      %940 = vmatprep.subr.bf16.mxu0 0
      %941 = vmatpush1.bf16.msra.mxu0 0
      %942 = vmatprep.mubr.bf16.mxu0 0
      %943 = vmatmul.mubr.bf16.gmra.mrb[0].mxu0 %v902
      %v944 = vpop.f32.mrb[0].mxu0
      %v945 = vadd.f32 %v894, %v944
      %v946 = vpop.f32.mrb[0].mxu0
      %v947 = vpop.f32.mrb[0].mxu0
      %v948 = vadd.f32 %v894, %v947
      %v949 = vpop.f32.mrb[0].mxu0
      %950 = vmatprep.mubr.bf16.mxu0 0
      %951 = vmatmul.mubr.bf16.gmra.mrb[0].mxu0 %v905
      %v952 = vpop.f32.mrb[0].mxu0
      %v953 = vadd.f32 %v894, %v952
      %v954 = vpop.f32.mrb[0].mxu0
      %v955 = vpop.f32.mrb[0].mxu0
      %v956 = vadd.f32 %v894, %v955
      %v957 = vpop.f32.mrb[0].mxu0
      %958 = vdwg.mxu0
      %v960 = vsel %vm232, %v879, 0
      %962 = vmatprep.subr.bf16.mxu0 0
      %963 = vmatpush1.bf16.msra.mxu0 %v960
      %964 = vmatprep.subr.bf16.mxu0 0
      %965 = vmatpush1.bf16.msra.mxu0 0
      %966 = vmatprep.subr.bf16.mxu0 0
      %967 = vmatpush1.bf16.msra.mxu0 0
      %968 = vmatprep.subr.bf16.mxu0 0
      %969 = vmatpush1.bf16.msra.mxu0 0
      %970 = vmatprep.subr.bf16.mxu0 0
      %971 = vmatpush1.bf16.msra.mxu0 0
      %972 = vmatprep.subr.bf16.mxu0 0
      %973 = vmatpush1.bf16.msra.mxu0 0
      %974 = vmatprep.subr.bf16.mxu0 0
      %975 = vmatpush1.bf16.msra.mxu0 0
      %976 = vmatprep.subr.bf16.mxu0 0
      %977 = vmatpush1.bf16.msra.mxu0 0
      %978 = vmatprep.subr.bf16.mxu0 0
      %979 = vmatpush1.bf16.msra.mxu0 0
      %980 = vmatprep.subr.bf16.mxu0 0
      %981 = vmatpush1.bf16.msra.mxu0 0
      %982 = vmatprep.subr.bf16.mxu0 0
      %983 = vmatpush1.bf16.msra.mxu0 0
      %984 = vmatprep.subr.bf16.mxu0 0
      %985 = vmatpush1.bf16.msra.mxu0 0
      %986 = vmatprep.subr.bf16.mxu0 0
      %987 = vmatpush1.bf16.msra.mxu0 0
      %988 = vmatprep.subr.bf16.mxu0 0
      %989 = vmatpush1.bf16.msra.mxu0 0
      %990 = vmatprep.subr.bf16.mxu0 0
      %991 = vmatpush1.bf16.msra.mxu0 0
      %992 = vmatprep.subr.bf16.mxu0 0
      %993 = vmatpush1.bf16.msra.mxu0 0
      %994 = vmatprep.mubr.bf16.mxu0 0
      %995 = vmatmul.mubr.bf16.gmra.mrb[0].mxu0 %v230
      %v996 = vpop.f32.mrb[0].mxu0
      %v997 = vadd.f32 0.0, %v996
      %v998 = vpop.f32.mrb[0].mxu0
      %v999 = vpop.f32.mrb[0].mxu0
      %v1000 = vpop.f32.mrb[0].mxu0
      %1001 = vdwg.mxu0
      %v1003 = vsel %vm232, %v881, 0
      %1005 = vmatprep.subr.bf16.mxu0 0
      %1006 = vmatpush1.bf16.msra.mxu0 %v1003
      %1007 = vmatprep.subr.bf16.mxu0 0
      %1008 = vmatpush1.bf16.msra.mxu0 0
      %1009 = vmatprep.subr.bf16.mxu0 0
      %1010 = vmatpush1.bf16.msra.mxu0 0
      %1011 = vmatprep.subr.bf16.mxu0 0
      %1012 = vmatpush1.bf16.msra.mxu0 0
      %1013 = vmatprep.subr.bf16.mxu0 0
      %1014 = vmatpush1.bf16.msra.mxu0 0
      %1015 = vmatprep.subr.bf16.mxu0 0
      %1016 = vmatpush1.bf16.msra.mxu0 0
      %1017 = vmatprep.subr.bf16.mxu0 0
      %1018 = vmatpush1.bf16.msra.mxu0 0
      %1019 = vmatprep.subr.bf16.mxu0 0
      %1020 = vmatpush1.bf16.msra.mxu0 0
      %1021 = vmatprep.subr.bf16.mxu0 0
      %1022 = vmatpush1.bf16.msra.mxu0 0
      %1023 = vmatprep.subr.bf16.mxu0 0
      %1024 = vmatpush1.bf16.msra.mxu0 0
      %1025 = vmatprep.subr.bf16.mxu0 0
      %1026 = vmatpush1.bf16.msra.mxu0 0
      %1027 = vmatprep.subr.bf16.mxu0 0
      %1028 = vmatpush1.bf16.msra.mxu0 0
      %1029 = vmatprep.subr.bf16.mxu0 0
      %1030 = vmatpush1.bf16.msra.mxu0 0
      %1031 = vmatprep.subr.bf16.mxu0 0
      %1032 = vmatpush1.bf16.msra.mxu0 0
      %1033 = vmatprep.subr.bf16.mxu0 0
      %1034 = vmatpush1.bf16.msra.mxu0 0
      %1035 = vmatprep.subr.bf16.mxu0 0
      %1036 = vmatpush1.bf16.msra.mxu0 0
      %1037 = vmatprep.mubr.bf16.mxu0 0
      %1038 = vmatmul.mubr.bf16.gmra.mrb[0].mxu0 %v230
      %v1039 = vpop.f32.mrb[0].mxu0
      %v1040 = vadd.f32 0.0, %v1039
      %v1041 = vpop.f32.mrb[0].mxu0
      %v1042 = vpop.f32.mrb[0].mxu0
      %v1043 = vpop.f32.mrb[0].mxu0
      %1044 = vdwg.mxu0
      %v1045 = vadd.f32 %v945, %v997
      %v1046 = vxor.u32 %v1045, 2147483648
      %v1047 = vmul.f32 %v1046, 1.442695
      %v1048 = vpow.pop %v1047
      %v1049 = vadd.f32 %v1048, 1.0
      %v1050 = vrcp.pop %v1049
      %v1051 = vmul.f32 1.0, %v1050
      %1053 = vrot.lane.b32.xlu0 %v1040, 8
      %v1054 = vpop.permute.xlu0 %1053
      %v1056 = vadd.f32 %v945, %v1054
      %v1057 = vxor.u32 %v1056, 2147483648
      %v1058 = vmul.f32 %v1057, 1.442695
      %v1059 = vpow.pop %v1058
      %v1060 = vadd.f32 %v1059, 1.0
      %v1061 = vrcp.pop %v1060
      %v1062 = vmul.f32 1.0, %v1061
      %v1064 = vsel %vm232, %v883, 0
      %1066 = vmatprep.subr.bf16.mxu0 0
      %1067 = vmatpush1.bf16.msra.mxu0 %v1064
      %1068 = vmatprep.subr.bf16.mxu0 0
      %1069 = vmatpush1.bf16.msra.mxu0 0
      %1070 = vmatprep.subr.bf16.mxu0 0
      %1071 = vmatpush1.bf16.msra.mxu0 0
      %1072 = vmatprep.subr.bf16.mxu0 0
      %1073 = vmatpush1.bf16.msra.mxu0 0
      %1074 = vmatprep.subr.bf16.mxu0 0
      %1075 = vmatpush1.bf16.msra.mxu0 0
      %1076 = vmatprep.subr.bf16.mxu0 0
      %1077 = vmatpush1.bf16.msra.mxu0 0
      %1078 = vmatprep.subr.bf16.mxu0 0
      %1079 = vmatpush1.bf16.msra.mxu0 0
      %1080 = vmatprep.subr.bf16.mxu0 0
      %1081 = vmatpush1.bf16.msra.mxu0 0
      %1082 = vmatprep.subr.bf16.mxu0 0
      %1083 = vmatpush1.bf16.msra.mxu0 0
      %1084 = vmatprep.subr.bf16.mxu0 0
      %1085 = vmatpush1.bf16.msra.mxu0 0
      %1086 = vmatprep.subr.bf16.mxu0 0
      %1087 = vmatpush1.bf16.msra.mxu0 0
      %1088 = vmatprep.subr.bf16.mxu0 0
      %1089 = vmatpush1.bf16.msra.mxu0 0
      %1090 = vmatprep.subr.bf16.mxu0 0
      %1091 = vmatpush1.bf16.msra.mxu0 0
      %1092 = vmatprep.subr.bf16.mxu0 0
      %1093 = vmatpush1.bf16.msra.mxu0 0
      %1094 = vmatprep.subr.bf16.mxu0 0
      %1095 = vmatpush1.bf16.msra.mxu0 0
      %1096 = vmatprep.subr.bf16.mxu0 0
      %1097 = vmatpush1.bf16.msra.mxu0 0
      %1098 = vmatprep.mubr.bf16.mxu0 0
      %1099 = vmatmul.mubr.bf16.gmra.mrb[0].mxu0 %v230
      %v1100 = vpop.f32.mrb[0].mxu0
      %v1101 = vadd.f32 %v888, %v1100
      %v1102 = vpop.f32.mrb[0].mxu0
      %v1103 = vpop.f32.mrb[0].mxu0
      %v1104 = vpop.f32.mrb[0].mxu0
      %1105 = vdwg.mxu0
      %v1106 = vmul.f32 %v1051, %v1101
      %1108 = vrot.lane.b32.xlu0 %v1106, 16
      %v1109 = vpop.permute.xlu0 %1108
      %v1111 = vadd.f32 %v945, %v1109
      %v1112 = vtanh.pop %v1111
      %v1113 = vsub.f32 1.0, %v1062
      %1115 = vrot.lane.b32.xlu0 %v1112, 120
      %v1116 = vpop.permute.xlu0 %1115
      %v1118 = vmul.f32 %v1113, %v1116
      %v1119 = vmul.f32 %v1062, 0.0
      %v1120 = vadd.f32 %v1118, %v1119
      %v1121 = vpack.c.bf16 %v1120, %v1120
      %1123 = vrot.lane.b32.xlu0 %v1121, 120
      %v1124 = vpop.permute.xlu0 %1123
      %v1126 = vsel %vm228, %v1124, 0
      %1128 = vmatprep.subr.bf16.mxu0 0
      %1129 = vmatpush1.bf16.msra.mxu0 %v960
      %1130 = vmatprep.subr.bf16.mxu0 0
      %1131 = vmatpush1.bf16.msra.mxu0 0
      %1132 = vmatprep.subr.bf16.mxu0 0
      %1133 = vmatpush1.bf16.msra.mxu0 0
      %1134 = vmatprep.subr.bf16.mxu0 0
      %1135 = vmatpush1.bf16.msra.mxu0 0
      %1136 = vmatprep.subr.bf16.mxu0 0
      %1137 = vmatpush1.bf16.msra.mxu0 0
      %1138 = vmatprep.subr.bf16.mxu0 0
      %1139 = vmatpush1.bf16.msra.mxu0 0
      %1140 = vmatprep.subr.bf16.mxu0 0
      %1141 = vmatpush1.bf16.msra.mxu0 0
      %1142 = vmatprep.subr.bf16.mxu0 0
      %1143 = vmatpush1.bf16.msra.mxu0 0
      %1144 = vmatprep.subr.bf16.mxu0 0
      %1145 = vmatpush1.bf16.msra.mxu0 0
      %1146 = vmatprep.subr.bf16.mxu0 0
      %1147 = vmatpush1.bf16.msra.mxu0 0
      %1148 = vmatprep.subr.bf16.mxu0 0
      %1149 = vmatpush1.bf16.msra.mxu0 0
      %1150 = vmatprep.subr.bf16.mxu0 0
      %1151 = vmatpush1.bf16.msra.mxu0 0
      %1152 = vmatprep.subr.bf16.mxu0 0
      %1153 = vmatpush1.bf16.msra.mxu0 0
      %1154 = vmatprep.subr.bf16.mxu0 0
      %1155 = vmatpush1.bf16.msra.mxu0 0
      %1156 = vmatprep.subr.bf16.mxu0 0
      %1157 = vmatpush1.bf16.msra.mxu0 0
      %1158 = vmatprep.subr.bf16.mxu0 0
      %1159 = vmatpush1.bf16.msra.mxu0 0
      %1160 = vmatprep.mubr.bf16.mxu0 0
      %1161 = vmatmul.mubr.bf16.gmra.mrb[0].mxu0 %v1126
      %v1162 = vpop.f32.mrb[0].mxu0
      %v1163 = vadd.f32 0.0, %v1162
      %v1164 = vpop.f32.mrb[0].mxu0
      %v1165 = vpop.f32.mrb[0].mxu0
      %v1166 = vpop.f32.mrb[0].mxu0
      %1167 = vdwg.mxu0
      %1168 = vmatprep.subr.bf16.mxu0 0
      %1169 = vmatpush1.bf16.msra.mxu0 %v1003
      %1170 = vmatprep.subr.bf16.mxu0 0
      %1171 = vmatpush1.bf16.msra.mxu0 0
      %1172 = vmatprep.subr.bf16.mxu0 0
      %1173 = vmatpush1.bf16.msra.mxu0 0
      %1174 = vmatprep.subr.bf16.mxu0 0
      %1175 = vmatpush1.bf16.msra.mxu0 0
      %1176 = vmatprep.subr.bf16.mxu0 0
      %1177 = vmatpush1.bf16.msra.mxu0 0
      %1178 = vmatprep.subr.bf16.mxu0 0
      %1179 = vmatpush1.bf16.msra.mxu0 0
      %1180 = vmatprep.subr.bf16.mxu0 0
      %1181 = vmatpush1.bf16.msra.mxu0 0
      %1182 = vmatprep.subr.bf16.mxu0 0
      %1183 = vmatpush1.bf16.msra.mxu0 0
      %1184 = vmatprep.subr.bf16.mxu0 0
      %1185 = vmatpush1.bf16.msra.mxu0 0
      %1186 = vmatprep.subr.bf16.mxu0 0
      %1187 = vmatpush1.bf16.msra.mxu0 0
      %1188 = vmatprep.subr.bf16.mxu0 0
      %1189 = vmatpush1.bf16.msra.mxu0 0
      %1190 = vmatprep.subr.bf16.mxu0 0
      %1191 = vmatpush1.bf16.msra.mxu0 0
      %1192 = vmatprep.subr.bf16.mxu0 0
      %1193 = vmatpush1.bf16.msra.mxu0 0
      %1194 = vmatprep.subr.bf16.mxu0 0
      %1195 = vmatpush1.bf16.msra.mxu0 0
      %1196 = vmatprep.subr.bf16.mxu0 0
      %1197 = vmatpush1.bf16.msra.mxu0 0
      %1198 = vmatprep.subr.bf16.mxu0 0
      %1199 = vmatpush1.bf16.msra.mxu0 0
      %1200 = vmatprep.mubr.bf16.mxu0 0
      %1201 = vmatmul.mubr.bf16.gmra.mrb[0].mxu0 %v1126
      %v1202 = vpop.f32.mrb[0].mxu0
      %v1203 = vadd.f32 0.0, %v1202
      %v1204 = vpop.f32.mrb[0].mxu0
      %v1205 = vpop.f32.mrb[0].mxu0
      %v1206 = vpop.f32.mrb[0].mxu0
      %1207 = vdwg.mxu0
      %v1208 = vadd.f32 %v948, %v1163
      %v1209 = vxor.u32 %v1208, 2147483648
      %v1210 = vmul.f32 %v1209, 1.442695
      %v1211 = vpow.pop %v1210
      %v1212 = vadd.f32 %v1211, 1.0
      %v1213 = vrcp.pop %v1212
      %v1214 = vmul.f32 1.0, %v1213
      %1216 = vrot.lane.b32.xlu0 %v1203, 8
      %v1217 = vpop.permute.xlu0 %1216
      %v1219 = vadd.f32 %v948, %v1217
      %v1220 = vxor.u32 %v1219, 2147483648
      %v1221 = vmul.f32 %v1220, 1.442695
      %v1222 = vpow.pop %v1221
      %v1223 = vadd.f32 %v1222, 1.0
      %v1224 = vrcp.pop %v1223
      %v1225 = vmul.f32 1.0, %v1224
      %1226 = vmatprep.subr.bf16.mxu0 0
      %1227 = vmatpush1.bf16.msra.mxu0 %v1064
      %1228 = vmatprep.subr.bf16.mxu0 0
      %1229 = vmatpush1.bf16.msra.mxu0 0
      %1230 = vmatprep.subr.bf16.mxu0 0
      %1231 = vmatpush1.bf16.msra.mxu0 0
      %1232 = vmatprep.subr.bf16.mxu0 0
      %1233 = vmatpush1.bf16.msra.mxu0 0
      %1234 = vmatprep.subr.bf16.mxu0 0
      %1235 = vmatpush1.bf16.msra.mxu0 0
      %1236 = vmatprep.subr.bf16.mxu0 0
      %1237 = vmatpush1.bf16.msra.mxu0 0
      %1238 = vmatprep.subr.bf16.mxu0 0
      %1239 = vmatpush1.bf16.msra.mxu0 0
      %1240 = vmatprep.subr.bf16.mxu0 0
      %1241 = vmatpush1.bf16.msra.mxu0 0
      %1242 = vmatprep.subr.bf16.mxu0 0
      %1243 = vmatpush1.bf16.msra.mxu0 0
      %1244 = vmatprep.subr.bf16.mxu0 0
      %1245 = vmatpush1.bf16.msra.mxu0 0
      %1246 = vmatprep.subr.bf16.mxu0 0
      %1247 = vmatpush1.bf16.msra.mxu0 0
      %1248 = vmatprep.subr.bf16.mxu0 0
      %1249 = vmatpush1.bf16.msra.mxu0 0
      %1250 = vmatprep.subr.bf16.mxu0 0
      %1251 = vmatpush1.bf16.msra.mxu0 0
      %1252 = vmatprep.subr.bf16.mxu0 0
      %1253 = vmatpush1.bf16.msra.mxu0 0
      %1254 = vmatprep.subr.bf16.mxu0 0
      %1255 = vmatpush1.bf16.msra.mxu0 0
      %1256 = vmatprep.subr.bf16.mxu0 0
      %1257 = vmatpush1.bf16.msra.mxu0 0
      %1258 = vmatprep.mubr.bf16.mxu0 0
      %1259 = vmatmul.mubr.bf16.gmra.mrb[0].mxu0 %v1126
      %v1260 = vpop.f32.mrb[0].mxu0
      %v1261 = vadd.f32 %v888, %v1260
      %v1262 = vpop.f32.mrb[0].mxu0
      %v1263 = vpop.f32.mrb[0].mxu0
      %v1264 = vpop.f32.mrb[0].mxu0
      %1265 = vdwg.mxu0
      %v1266 = vmul.f32 %v1214, %v1261
      %1268 = vrot.lane.b32.xlu0 %v1266, 16
      %v1269 = vpop.permute.xlu0 %1268
      %v1271 = vadd.f32 %v948, %v1269
      %v1272 = vtanh.pop %v1271
      %v1273 = vsub.f32 1.0, %v1225
      %1275 = vrot.lane.b32.xlu0 %v1272, 120
      %v1276 = vpop.permute.xlu0 %1275
      %v1278 = vmul.f32 %v1273, %v1276
      %v1279 = vmul.f32 %v1225, %v1120
      %v1280 = vadd.f32 %v1278, %v1279
      %v1281 = vpack.c.bf16 %v1280, %v1280
      %1283 = vrot.lane.b32.xlu0 %v1281, 120
      %v1284 = vpop.permute.xlu0 %1283
      %v1286 = vsel %vm228, %v1284, 0
      %1288 = vmatprep.subr.bf16.mxu0 0
      %1289 = vmatpush1.bf16.msra.mxu0 %v960
      %1290 = vmatprep.subr.bf16.mxu0 0
      %1291 = vmatpush1.bf16.msra.mxu0 0
      %1292 = vmatprep.subr.bf16.mxu0 0
      %1293 = vmatpush1.bf16.msra.mxu0 0
      %1294 = vmatprep.subr.bf16.mxu0 0
      %1295 = vmatpush1.bf16.msra.mxu0 0
      %1296 = vmatprep.subr.bf16.mxu0 0
      %1297 = vmatpush1.bf16.msra.mxu0 0
      %1298 = vmatprep.subr.bf16.mxu0 0
      %1299 = vmatpush1.bf16.msra.mxu0 0
      %1300 = vmatprep.subr.bf16.mxu0 0
      %1301 = vmatpush1.bf16.msra.mxu0 0
      %1302 = vmatprep.subr.bf16.mxu0 0
      %1303 = vmatpush1.bf16.msra.mxu0 0
      %1304 = vmatprep.subr.bf16.mxu0 0
      %1305 = vmatpush1.bf16.msra.mxu0 0
      %1306 = vmatprep.subr.bf16.mxu0 0
      %1307 = vmatpush1.bf16.msra.mxu0 0
      %1308 = vmatprep.subr.bf16.mxu0 0
      %1309 = vmatpush1.bf16.msra.mxu0 0
      %1310 = vmatprep.subr.bf16.mxu0 0
      %1311 = vmatpush1.bf16.msra.mxu0 0
      %1312 = vmatprep.subr.bf16.mxu0 0
      %1313 = vmatpush1.bf16.msra.mxu0 0
      %1314 = vmatprep.subr.bf16.mxu0 0
      %1315 = vmatpush1.bf16.msra.mxu0 0
      %1316 = vmatprep.subr.bf16.mxu0 0
      %1317 = vmatpush1.bf16.msra.mxu0 0
      %1318 = vmatprep.subr.bf16.mxu0 0
      %1319 = vmatpush1.bf16.msra.mxu0 0
      %1320 = vmatprep.mubr.bf16.mxu0 0
      %1321 = vmatmul.mubr.bf16.gmra.mrb[0].mxu0 %v1286
      %v1322 = vpop.f32.mrb[0].mxu0
      %v1323 = vadd.f32 0.0, %v1322
      %v1324 = vpop.f32.mrb[0].mxu0
      %v1325 = vpop.f32.mrb[0].mxu0
      %v1326 = vpop.f32.mrb[0].mxu0
      %1327 = vdwg.mxu0
      %1328 = vmatprep.subr.bf16.mxu0 0
      %1329 = vmatpush1.bf16.msra.mxu0 %v1003
      %1330 = vmatprep.subr.bf16.mxu0 0
      %1331 = vmatpush1.bf16.msra.mxu0 0
      %1332 = vmatprep.subr.bf16.mxu0 0
      %1333 = vmatpush1.bf16.msra.mxu0 0
      %1334 = vmatprep.subr.bf16.mxu0 0
      %1335 = vmatpush1.bf16.msra.mxu0 0
      %1336 = vmatprep.subr.bf16.mxu0 0
      %1337 = vmatpush1.bf16.msra.mxu0 0
      %1338 = vmatprep.subr.bf16.mxu0 0
      %1339 = vmatpush1.bf16.msra.mxu0 0
      %1340 = vmatprep.subr.bf16.mxu0 0
      %1341 = vmatpush1.bf16.msra.mxu0 0
      %1342 = vmatprep.subr.bf16.mxu0 0
      %1343 = vmatpush1.bf16.msra.mxu0 0
      %1344 = vmatprep.subr.bf16.mxu0 0
      %1345 = vmatpush1.bf16.msra.mxu0 0
      %1346 = vmatprep.subr.bf16.mxu0 0
      %1347 = vmatpush1.bf16.msra.mxu0 0
      %1348 = vmatprep.subr.bf16.mxu0 0
      %1349 = vmatpush1.bf16.msra.mxu0 0
      %1350 = vmatprep.subr.bf16.mxu0 0
      %1351 = vmatpush1.bf16.msra.mxu0 0
      %1352 = vmatprep.subr.bf16.mxu0 0
      %1353 = vmatpush1.bf16.msra.mxu0 0
      %1354 = vmatprep.subr.bf16.mxu0 0
      %1355 = vmatpush1.bf16.msra.mxu0 0
      %1356 = vmatprep.subr.bf16.mxu0 0
      %1357 = vmatpush1.bf16.msra.mxu0 0
      %1358 = vmatprep.subr.bf16.mxu0 0
      %1359 = vmatpush1.bf16.msra.mxu0 0
      %1360 = vmatprep.mubr.bf16.mxu0 0
      %1361 = vmatmul.mubr.bf16.gmra.mrb[0].mxu0 %v1286
      %v1362 = vpop.f32.mrb[0].mxu0
      %v1363 = vadd.f32 0.0, %v1362
      %v1364 = vpop.f32.mrb[0].mxu0
      %v1365 = vpop.f32.mrb[0].mxu0
      %v1366 = vpop.f32.mrb[0].mxu0
      %1367 = vdwg.mxu0
      %v1368 = vadd.f32 %v953, %v1323
      %v1369 = vxor.u32 %v1368, 2147483648
      %v1370 = vmul.f32 %v1369, 1.442695
      %v1371 = vpow.pop %v1370
      %v1372 = vadd.f32 %v1371, 1.0
      %v1373 = vrcp.pop %v1372
      %v1374 = vmul.f32 1.0, %v1373
      %1376 = vrot.lane.b32.xlu0 %v1363, 8
      %v1377 = vpop.permute.xlu0 %1376
      %v1379 = vadd.f32 %v953, %v1377
      %v1380 = vxor.u32 %v1379, 2147483648
      %v1381 = vmul.f32 %v1380, 1.442695
      %v1382 = vpow.pop %v1381
      %v1383 = vadd.f32 %v1382, 1.0
      %v1384 = vrcp.pop %v1383
      %v1385 = vmul.f32 1.0, %v1384
      %1386 = vmatprep.subr.bf16.mxu0 0
      %1387 = vmatpush1.bf16.msra.mxu0 %v1064
      %1388 = vmatprep.subr.bf16.mxu0 0
      %1389 = vmatpush1.bf16.msra.mxu0 0
      %1390 = vmatprep.subr.bf16.mxu0 0
      %1391 = vmatpush1.bf16.msra.mxu0 0
      %1392 = vmatprep.subr.bf16.mxu0 0
      %1393 = vmatpush1.bf16.msra.mxu0 0
      %1394 = vmatprep.subr.bf16.mxu0 0
      %1395 = vmatpush1.bf16.msra.mxu0 0
      %1396 = vmatprep.subr.bf16.mxu0 0
      %1397 = vmatpush1.bf16.msra.mxu0 0
      %1398 = vmatprep.subr.bf16.mxu0 0
      %1399 = vmatpush1.bf16.msra.mxu0 0
      %1400 = vmatprep.subr.bf16.mxu0 0
      %1401 = vmatpush1.bf16.msra.mxu0 0
      %1402 = vmatprep.subr.bf16.mxu0 0
      %1403 = vmatpush1.bf16.msra.mxu0 0
      %1404 = vmatprep.subr.bf16.mxu0 0
      %1405 = vmatpush1.bf16.msra.mxu0 0
      %1406 = vmatprep.subr.bf16.mxu0 0
      %1407 = vmatpush1.bf16.msra.mxu0 0
      %1408 = vmatprep.subr.bf16.mxu0 0
      %1409 = vmatpush1.bf16.msra.mxu0 0
      %1410 = vmatprep.subr.bf16.mxu0 0
      %1411 = vmatpush1.bf16.msra.mxu0 0
      %1412 = vmatprep.subr.bf16.mxu0 0
      %1413 = vmatpush1.bf16.msra.mxu0 0
      %1414 = vmatprep.subr.bf16.mxu0 0
      %1415 = vmatpush1.bf16.msra.mxu0 0
      %1416 = vmatprep.subr.bf16.mxu0 0
      %1417 = vmatpush1.bf16.msra.mxu0 0
      %1418 = vmatprep.mubr.bf16.mxu0 0
      %1419 = vmatmul.mubr.bf16.gmra.mrb[0].mxu0 %v1286
      %v1420 = vpop.f32.mrb[0].mxu0
      %v1421 = vadd.f32 %v888, %v1420
      %v1422 = vpop.f32.mrb[0].mxu0
      %v1423 = vpop.f32.mrb[0].mxu0
      %v1424 = vpop.f32.mrb[0].mxu0
      %1425 = vdwg.mxu0
      %v1426 = vmul.f32 %v1374, %v1421
      %1428 = vrot.lane.b32.xlu0 %v1426, 16
      %v1429 = vpop.permute.xlu0 %1428
      %v1431 = vadd.f32 %v953, %v1429
      %v1432 = vtanh.pop %v1431
      %v1433 = vsub.f32 1.0, %v1385
      %1435 = vrot.lane.b32.xlu0 %v1432, 120
      %v1436 = vpop.permute.xlu0 %1435
      %v1438 = vmul.f32 %v1433, %v1436
      %v1439 = vmul.f32 %v1385, %v1280
      %v1440 = vadd.f32 %v1438, %v1439
      %v1441 = vpack.c.bf16 %v1440, %v1440
      %1443 = vrot.lane.b32.xlu0 %v1441, 120
      %v1444 = vpop.permute.xlu0 %1443
      %v1446 = vsel %vm228, %v1444, 0
      %1448 = vmatprep.subr.bf16.mxu0 0
      %1449 = vmatpush1.bf16.msra.mxu0 %v960
      %1450 = vmatprep.subr.bf16.mxu0 0
      %1451 = vmatpush1.bf16.msra.mxu0 0
      %1452 = vmatprep.subr.bf16.mxu0 0
      %1453 = vmatpush1.bf16.msra.mxu0 0
      %1454 = vmatprep.subr.bf16.mxu0 0
      %1455 = vmatpush1.bf16.msra.mxu0 0
      %1456 = vmatprep.subr.bf16.mxu0 0
      %1457 = vmatpush1.bf16.msra.mxu0 0
      %1458 = vmatprep.subr.bf16.mxu0 0
      %1459 = vmatpush1.bf16.msra.mxu0 0
      %1460 = vmatprep.subr.bf16.mxu0 0
      %1461 = vmatpush1.bf16.msra.mxu0 0
      %1462 = vmatprep.subr.bf16.mxu0 0
      %1463 = vmatpush1.bf16.msra.mxu0 0
      %1464 = vmatprep.subr.bf16.mxu0 0
      %1465 = vmatpush1.bf16.msra.mxu0 0
      %1466 = vmatprep.subr.bf16.mxu0 0
      %1467 = vmatpush1.bf16.msra.mxu0 0
      %1468 = vmatprep.subr.bf16.mxu0 0
      %1469 = vmatpush1.bf16.msra.mxu0 0
      %1470 = vmatprep.subr.bf16.mxu0 0
      %1471 = vmatpush1.bf16.msra.mxu0 0
      %1472 = vmatprep.subr.bf16.mxu0 0
      %1473 = vmatpush1.bf16.msra.mxu0 0
      %1474 = vmatprep.subr.bf16.mxu0 0
      %1475 = vmatpush1.bf16.msra.mxu0 0
      %1476 = vmatprep.subr.bf16.mxu0 0
      %1477 = vmatpush1.bf16.msra.mxu0 0
      %1478 = vmatprep.subr.bf16.mxu0 0
      %1479 = vmatpush1.bf16.msra.mxu0 0
      %1480 = vmatprep.mubr.bf16.mxu0 0
      %1481 = vmatmul.mubr.bf16.gmra.mrb[0].mxu0 %v1446
      %v1482 = vpop.f32.mrb[0].mxu0
      %v1483 = vadd.f32 0.0, %v1482
      %v1484 = vpop.f32.mrb[0].mxu0
      %v1485 = vpop.f32.mrb[0].mxu0
      %v1486 = vpop.f32.mrb[0].mxu0
      %1487 = vdwg.mxu0
      %1488 = vmatprep.subr.bf16.mxu0 0
      %1489 = vmatpush1.bf16.msra.mxu0 %v1003
      %1490 = vmatprep.subr.bf16.mxu0 0
      %1491 = vmatpush1.bf16.msra.mxu0 0
      %1492 = vmatprep.subr.bf16.mxu0 0
      %1493 = vmatpush1.bf16.msra.mxu0 0
      %1494 = vmatprep.subr.bf16.mxu0 0
      %1495 = vmatpush1.bf16.msra.mxu0 0
      %1496 = vmatprep.subr.bf16.mxu0 0
      %1497 = vmatpush1.bf16.msra.mxu0 0
      %1498 = vmatprep.subr.bf16.mxu0 0
      %1499 = vmatpush1.bf16.msra.mxu0 0
      %1500 = vmatprep.subr.bf16.mxu0 0
      %1501 = vmatpush1.bf16.msra.mxu0 0
      %1502 = vmatprep.subr.bf16.mxu0 0
      %1503 = vmatpush1.bf16.msra.mxu0 0
      %1504 = vmatprep.subr.bf16.mxu0 0
      %1505 = vmatpush1.bf16.msra.mxu0 0
      %1506 = vmatprep.subr.bf16.mxu0 0
      %1507 = vmatpush1.bf16.msra.mxu0 0
      %1508 = vmatprep.subr.bf16.mxu0 0
      %1509 = vmatpush1.bf16.msra.mxu0 0
      %1510 = vmatprep.subr.bf16.mxu0 0
      %1511 = vmatpush1.bf16.msra.mxu0 0
      %1512 = vmatprep.subr.bf16.mxu0 0
      %1513 = vmatpush1.bf16.msra.mxu0 0
      %1514 = vmatprep.subr.bf16.mxu0 0
      %1515 = vmatpush1.bf16.msra.mxu0 0
      %1516 = vmatprep.subr.bf16.mxu0 0
      %1517 = vmatpush1.bf16.msra.mxu0 0
      %1518 = vmatprep.subr.bf16.mxu0 0
      %1519 = vmatpush1.bf16.msra.mxu0 0
      %1520 = vmatprep.mubr.bf16.mxu0 0
      %1521 = vmatmul.mubr.bf16.gmra.mrb[0].mxu0 %v1446
      %v1522 = vpop.f32.mrb[0].mxu0
      %v1523 = vadd.f32 0.0, %v1522
      %v1524 = vpop.f32.mrb[0].mxu0
      %v1525 = vpop.f32.mrb[0].mxu0
      %v1526 = vpop.f32.mrb[0].mxu0
      %1527 = vdwg.mxu0
      %v1528 = vadd.f32 %v956, %v1483
      %v1529 = vxor.u32 %v1528, 2147483648
      %v1530 = vmul.f32 %v1529, 1.442695
      %v1531 = vpow.pop %v1530
      %v1532 = vadd.f32 %v1531, 1.0
      %v1533 = vrcp.pop %v1532
      %v1534 = vmul.f32 1.0, %v1533
      %1536 = vrot.lane.b32.xlu0 %v1523, 8
      %v1537 = vpop.permute.xlu0 %1536
      %v1539 = vadd.f32 %v956, %v1537
      %v1540 = vxor.u32 %v1539, 2147483648
      %v1541 = vmul.f32 %v1540, 1.442695
      %v1542 = vpow.pop %v1541
      %v1543 = vadd.f32 %v1542, 1.0
      %v1544 = vrcp.pop %v1543
      %v1545 = vmul.f32 1.0, %v1544
      %1546 = vmatprep.subr.bf16.mxu0 0
      %1547 = vmatpush1.bf16.msra.mxu0 %v1064
      %1548 = vmatprep.subr.bf16.mxu0 0
      %1549 = vmatpush1.bf16.msra.mxu0 0
      %1550 = vmatprep.subr.bf16.mxu0 0
      %1551 = vmatpush1.bf16.msra.mxu0 0
      %1552 = vmatprep.subr.bf16.mxu0 0
      %1553 = vmatpush1.bf16.msra.mxu0 0
      %1554 = vmatprep.subr.bf16.mxu0 0
      %1555 = vmatpush1.bf16.msra.mxu0 0
      %1556 = vmatprep.subr.bf16.mxu0 0
      %1557 = vmatpush1.bf16.msra.mxu0 0
      %1558 = vmatprep.subr.bf16.mxu0 0
      %1559 = vmatpush1.bf16.msra.mxu0 0
      %1560 = vmatprep.subr.bf16.mxu0 0
      %1561 = vmatpush1.bf16.msra.mxu0 0
      %1562 = vmatprep.subr.bf16.mxu0 0
      %1563 = vmatpush1.bf16.msra.mxu0 0
      %1564 = vmatprep.subr.bf16.mxu0 0
      %1565 = vmatpush1.bf16.msra.mxu0 0
      %1566 = vmatprep.subr.bf16.mxu0 0
      %1567 = vmatpush1.bf16.msra.mxu0 0
      %1568 = vmatprep.subr.bf16.mxu0 0
      %1569 = vmatpush1.bf16.msra.mxu0 0
      %1570 = vmatprep.subr.bf16.mxu0 0
      %1571 = vmatpush1.bf16.msra.mxu0 0
      %1572 = vmatprep.subr.bf16.mxu0 0
      %1573 = vmatpush1.bf16.msra.mxu0 0
      %1574 = vmatprep.subr.bf16.mxu0 0
      %1575 = vmatpush1.bf16.msra.mxu0 0
      %1576 = vmatprep.subr.bf16.mxu0 0
      %1577 = vmatpush1.bf16.msra.mxu0 0
      %1578 = vmatprep.mubr.bf16.mxu0 0
      %1579 = vmatmul.mubr.bf16.gmra.mrb[0].mxu0 %v1446
      %v1580 = vpop.f32.mrb[0].mxu0
      %v1581 = vadd.f32 %v888, %v1580
      %v1582 = vpop.f32.mrb[0].mxu0
      %v1583 = vpop.f32.mrb[0].mxu0
      %v1584 = vpop.f32.mrb[0].mxu0
      %1585 = vdwg.mxu0
      %v1586 = vmul.f32 %v1534, %v1581
      %1588 = vrot.lane.b32.xlu0 %v1586, 16
      %v1589 = vpop.permute.xlu0 %1588
      %v1591 = vadd.f32 %v956, %v1589
      %v1592 = vtanh.pop %v1591
      %v1593 = vsub.f32 1.0, %v1545
      %1595 = vrot.lane.b32.xlu0 %v1592, 120
      %v1596 = vpop.permute.xlu0 %1595
      %v1598 = vmul.f32 %v1593, %v1596
      %v1599 = vmul.f32 %v1545, %v1440
      %v1600 = vadd.f32 %v1598, %v1599
      %v1601 = vmul.f32 %v1600, %v1120
      %1603 = vrot.lane.b32.xlu0 %v1601, 120
      %v1604 = vpop.permute.xlu0 %1603
      %v1606 = vsel %vm228, %v1604, 0.0
      %1607 = vadd.xlane.f32.xlu0 %v1606
      %v1608 = vpop.xlane.xlu0 %1607
      %v1609 = vmul.f32 %v1608, 0.35355338
      %v1610 = vmul.f32 %v1600, %v1280
      %1612 = vrot.lane.b32.xlu0 %v1610, 120
      %v1613 = vpop.permute.xlu0 %1612
      %v1615 = vsel %vm228, %v1613, 0.0
      %1616 = vadd.xlane.f32.xlu0 %v1615
      %v1617 = vpop.xlane.xlu0 %1616
      %v1618 = vmul.f32 %v1617, 0.35355338
      %v1619 = vmul.f32 %v1600, %v1440
      %1621 = vrot.lane.b32.xlu0 %v1619, 120
      %v1622 = vpop.permute.xlu0 %1621
      %v1624 = vsel %vm228, %v1622, 0.0
      %1625 = vadd.xlane.f32.xlu0 %v1624
      %v1626 = vpop.xlane.xlu0 %1625
      %v1627 = vmul.f32 %v1626, 0.35355338
      %v1628 = vmul.f32 %v1600, %v1600
      %1630 = vrot.lane.b32.xlu0 %v1628, 120
      %v1631 = vpop.permute.xlu0 %1630
      %v1633 = vsel %vm228, %v1631, 0.0
      %1634 = vadd.xlane.f32.xlu0 %v1633
      %v1635 = vpop.xlane.xlu0 %1634
      %v1636 = vmul.f32 %v1635, 0.35355338
      %v1637 = vmax.f32 %v1609, %v1618
      %v1638 = vmax.f32 %v1637, %v1627
      %v1639 = vmax.f32 %v1638, %v1636
      %v1640 = vsub.f32 %v1609, %v1639
      %v1641 = vmul.f32 %v1640, 1.442695
      %v1642 = vpow.pop %v1641
      %v1643 = vsub.f32 %v1618, %v1639
      %v1644 = vmul.f32 %v1643, 1.442695
      %v1645 = vpow.pop %v1644
      %v1646 = vsub.f32 %v1627, %v1639
      %v1647 = vmul.f32 %v1646, 1.442695
      %v1648 = vpow.pop %v1647
      %v1649 = vsub.f32 %v1636, %v1639
      %v1650 = vmul.f32 %v1649, 1.442695
      %v1651 = vpow.pop %v1650
      %v1652 = vmul.f32 %v1642, %v1120
      %v1653 = vadd.f32 %v1642, %v1645
      %v1654 = vmul.f32 %v1645, %v1280
      %v1655 = vadd.f32 %v1652, %v1654
      %v1656 = vadd.f32 %v1653, %v1648
      %v1657 = vmul.f32 %v1648, %v1440
      %v1658 = vadd.f32 %v1655, %v1657
      %v1659 = vadd.f32 %v1656, %v1651
      %v1660 = vmul.f32 %v1651, %v1600
      %v1661 = vadd.f32 %v1658, %v1660
      %v1662 = vrcp.pop %v1659
      %v1663 = vmul.f32 %v1661, %v1662
      %1665 = vrot.lane.b32.xlu0 %v1663, 120
      %v1666 = vpop.permute.xlu0 %1665
      %v1668 = vrot.slane %v1663, 2
      %v1670 = vrot.slane %v1663, 4
      %1671 = vrot.lane.b32.xlu0 %v1670, 8
      %v1672 = vpop.permute.xlu0 %1671
      %v1674 = vsel %vm228, %v1666, %v1668
      %vm1675 = vcmask 130048
      %v1676 = vsel %vm1675, %v1674, %v1672
      %vm1677 = vcmask 1041408
      %v1678 = vsel %vm1677, %v1676, 0.0
      %v1679 = vld [vmem:[%s1 + $0x68] sm:$0xff]
      %v1680 = vld [vmem:[%s1 + $0x70] sm:$0xff]
      %v1681 = vld [vmem:[%s1 + $0x78] sm:$0xff]
      %v1682 = vpack.c.bf16 %v1680, %v1679
      %v1683 = vpack.c.bf16 %v1681, %v1681
      %v1684 = vld [vmem:[%s1 + $0x80] sm:$0x1]
      %v1685 = vpack.c.bf16 %v1678, %v1678
      %v1686 = vlaneseq
      %v1687 = vshrl.u32 %v1686, 7
      %v1688 = vsub.s32 0, %v1687
      %v1689 = vrot.slane %v1684, %v1688
      %vm1690 = vcmask 195584
      %v1692 = vsel %vm1690, %v1685, 0
      %v1695 = vsel %vm232, %v1683, 0
      %1697 = vmatprep.subr.bf16.mxu0 0
      %1698 = vmatpush1.bf16.msra.mxu0 %v1682
      %1699 = vmatprep.subr.bf16.mxu0 0
      %1700 = vmatpush1.bf16.msra.mxu0 %v1695
      %1701 = vmatprep.subr.bf16.mxu0 0
      %1702 = vmatpush1.bf16.msra.mxu0 0
      %1703 = vmatprep.subr.bf16.mxu0 0
      %1704 = vmatpush1.bf16.msra.mxu0 0
      %1705 = vmatprep.subr.bf16.mxu0 0
      %1706 = vmatpush1.bf16.msra.mxu0 0
      %1707 = vmatprep.subr.bf16.mxu0 0
      %1708 = vmatpush1.bf16.msra.mxu0 0
      %1709 = vmatprep.subr.bf16.mxu0 0
      %1710 = vmatpush1.bf16.msra.mxu0 0
      %1711 = vmatprep.subr.bf16.mxu0 0
      %1712 = vmatpush1.bf16.msra.mxu0 0
      %1713 = vmatprep.subr.bf16.mxu0 0
      %1714 = vmatpush1.bf16.msra.mxu0 0
      %1715 = vmatprep.subr.bf16.mxu0 0
      %1716 = vmatpush1.bf16.msra.mxu0 0
      %1717 = vmatprep.subr.bf16.mxu0 0
      %1718 = vmatpush1.bf16.msra.mxu0 0
      %1719 = vmatprep.subr.bf16.mxu0 0
      %1720 = vmatpush1.bf16.msra.mxu0 0
      %1721 = vmatprep.subr.bf16.mxu0 0
      %1722 = vmatpush1.bf16.msra.mxu0 0
      %1723 = vmatprep.subr.bf16.mxu0 0
      %1724 = vmatpush1.bf16.msra.mxu0 0
      %1725 = vmatprep.subr.bf16.mxu0 0
      %1726 = vmatpush1.bf16.msra.mxu0 0
      %1727 = vmatprep.subr.bf16.mxu0 0
      %1728 = vmatpush1.bf16.msra.mxu0 0
      %1729 = vmatprep.mubr.bf16.mxu0 0
      %1730 = vmatmul.mubr.bf16.gmra.mrb[0].mxu0 %v1692
      %v1731 = vpop.f32.mrb[0].mxu0
      %v1732 = vadd.f32 %v1689, %v1731
      %v1733 = vpop.f32.mrb[0].mxu0
      %v1734 = vpop.f32.mrb[0].mxu0
      %v1735 = vpop.f32.mrb[0].mxu0
      %1736 = vdwg.mxu0
      %v1737 = vld [vmem:[%s1 + $0x88] sm:$0xff]
      %v1738 = vld [vmem:[%s1 + $0x90] sm:$0xff]
      %v1739 = vld [vmem:[%s1 + $0x98] sm:$0xff]
      %v1740 = vpack.c.bf16 %v1738, %v1737
      %v1741 = vpack.c.bf16 %v1739, %v1739
      %v1742 = vld [vmem:[%s1 + $0xa0] sm:$0x1]
      %v1743 = vpack.c.bf16 %v1732, %v1732
      %v1744 = vlaneseq
      %v1745 = vshrl.u32 %v1744, 7
      %v1746 = vsub.s32 0, %v1745
      %v1747 = vrot.slane %v1742, %v1746
      %v1749 = vsel %vm1690, %v1743, 0
      %v1752 = vsel %vm232, %v1741, 0
      %1754 = vmatprep.subr.bf16.mxu0 0
      %1755 = vmatpush1.bf16.msra.mxu0 %v1740
      %1756 = vmatprep.subr.bf16.mxu0 0
      %1757 = vmatpush1.bf16.msra.mxu0 %v1752
      %1758 = vmatprep.subr.bf16.mxu0 0
      %1759 = vmatpush1.bf16.msra.mxu0 0
      %1760 = vmatprep.subr.bf16.mxu0 0
      %1761 = vmatpush1.bf16.msra.mxu0 0
      %1762 = vmatprep.subr.bf16.mxu0 0
      %1763 = vmatpush1.bf16.msra.mxu0 0
      %1764 = vmatprep.subr.bf16.mxu0 0
      %1765 = vmatpush1.bf16.msra.mxu0 0
      %1766 = vmatprep.subr.bf16.mxu0 0
      %1767 = vmatpush1.bf16.msra.mxu0 0
      %1768 = vmatprep.subr.bf16.mxu0 0
      %1769 = vmatpush1.bf16.msra.mxu0 0
      %1770 = vmatprep.subr.bf16.mxu0 0
      %1771 = vmatpush1.bf16.msra.mxu0 0
      %1772 = vmatprep.subr.bf16.mxu0 0
      %1773 = vmatpush1.bf16.msra.mxu0 0
      %1774 = vmatprep.subr.bf16.mxu0 0
      %1775 = vmatpush1.bf16.msra.mxu0 0
      %1776 = vmatprep.subr.bf16.mxu0 0
      %1777 = vmatpush1.bf16.msra.mxu0 0
      %1778 = vmatprep.subr.bf16.mxu0 0
      %1779 = vmatpush1.bf16.msra.mxu0 0
      %1780 = vmatprep.subr.bf16.mxu0 0
      %1781 = vmatpush1.bf16.msra.mxu0 0
      %1782 = vmatprep.subr.bf16.mxu0 0
      %1783 = vmatpush1.bf16.msra.mxu0 0
      %1784 = vmatprep.subr.bf16.mxu0 0
      %1785 = vmatpush1.bf16.msra.mxu0 0
      %1786 = vmatprep.mubr.bf16.mxu0 0
      %1787 = vmatmul.mubr.bf16.gmra.mrb[0].mxu0 %v1749
      %v1788 = vpop.f32.mrb[0].mxu0
      %v1789 = vadd.f32 %v1747, %v1788
      %v1790 = vpop.f32.mrb[0].mxu0
      %v1791 = vpop.f32.mrb[0].mxu0
      %v1792 = vpop.f32.mrb[0].mxu0
      %1793 = vdwg.mxu0
      %1794 = vst [vmem:[%s141] sm:$0xff] %v1789
      %p1795 = scmp.lt.s32.totalorder %s13, 7
      %s1796 = scalar_select %p1795, %s13, 7
      %s1797 = smul.addr %s1796, 8
      %s1798 = scalar_lea.vmem %s2, %s1797
      // Predicated region
      $region29: #{forward.1} parent=27 // pred_check
        %p1799 = pneg %p78
      $region30: #{forward.1} parent=27 // pred_check_branch
        %1801 = sbr.rel (%p1799) target = $region32
      $region31: #{forward.1} parent=27 // pred_region
        _
      $region32: #{forward.1} parent=27 // pred_fallthru
        _
    $region28: #{forward.1} parent=5 // pred_fallthru
      _
    %p1802 = scmp.le.s32.totalorder 2, %s8
    // Predicated region
    $region33: #{forward.1} parent=5 // pred_check
      %p1803 = pneg %p1802
    $region34: #{forward.1} parent=5 // pred_check_branch
      %1805 = sbr.rel (%p1803) target = $region36
    $region35: #{forward.1} parent=5 // pred_region
      %s1806 = ssub.s32 %s8, 2
      // Predicated region
      $region37: #{forward.1} parent=35 // pred_check
        %p1807 = pneg %p84
      $region38: #{forward.1} parent=35 // pred_check_branch
        %1809 = sbr.rel (%p1807) target = $region40
      $region39: #{forward.1} parent=35 // pred_region
        %p1810 = scmp.lt.s32.totalorder %s14, 7
        %s1811 = scalar_select %p1810, %s14, 7
        %s1812 = smul.addr %s1811, 8
        %s1813 = scalar_lea.vmem %s2, %s1812
      $region40: #{forward.1} parent=35 // pred_fallthru
        _
    $region36: #{forward.1} parent=5 // pred_fallthru
      _
  $region6: #{forward.1} parent=0 // loop_footer
    %s12 = sadd.s32 1, %s8
  $region7: #{forward.1} parent=0 // loop_footer_branch
    %7 = sbr.rel target = $region3
  $region8: #{forward.1} parent=0 // loop_exit
    _

</llo_original>
